<compile_context>
chip_gen: v7x
topology: tpu7x:2x2x1
jax: 0.10.0
libtpu: 0.0.40
codegen_flags: <defaults>
</compile_context>

<pallas_src>
import math
import jax
import jax.numpy as jnp
from jax import lax
from jax.experimental import pallas as pl
from jax.experimental.pallas import tpu as pltpu


_VMEM_LIMIT_BYTES = 32 * 1024 * 1024   # safe scoped limit on v5e/v6e (128 MiB phys) and v7x (64 MiB phys)


def _round_up(x, m):
    return ((x + m - 1) // m) * m


def _flat_halo(K, pad, W):
    """Leading / trailing zero halo on the flattened H*W axis so every tap's
    shifted slice [ky*W+kx : ky*W+kx+HW] stays in bounds and top/bottom rows read
    genuine zeros."""
    lead = pad * W + pad
    tail = (K - 1 - pad) * W + (K - 1 - pad)
    return lead, tail


# ----------------------------- Pallas kernel ------------------------------

def _make_conv_gemm_kernel(K, W, HW, pad):
    """Shifted-tap conv-GEMM kernel.  Per grid step (g, n):

      x_ref : (1, 1, Cp, Lp)     bf16  flat zero-padded image   (Lp = HW + halo)
      w_ref : (1, K*K, Fout, Cp) bf16  per-tap weights (resident across n)
      m_ref : (K, 1, HW)         f32   per-kx column-validity mask (kills W wrap-around)
      o_ref : (1, 1, Fout, HW)   f32   output block, accumulated over the K*K taps
    """
    def kernel(x_ref, w_ref, m_ref, o_ref):
        first = True
        for ky in range(K):
            for kx in range(K):
                t = ky * K + kx
                off = ky * W + kx                              # static flat shift of this tap
                xs = x_ref[0, 0, :, off:off + HW]              # (Cp, HW) bf16 (in-kernel im2col)
                r = jnp.dot(w_ref[0, t], xs,
                            preferred_element_type=jnp.float32)  # (Fout, HW) f32 on the MXU
                if kx != pad:
                    r = r * m_ref[kx]                          # zero wrapped left/right edge lanes
                if first:
                    o_ref[0, 0] = r
                    first = False
                else:
                    o_ref[0, 0] += r
    return kernel


def _conv_gain_fused(x, w, *, K, W, HW, pad):
    """x: (G, N, Cp, Lp) bf16, w: (G, K*K, Fout, Cp) bf16 -> (G, N, Fout, HW) f32."""
    G, N, Cp, Lp = x.shape
    _, KK, Fout, _ = w.shape
    lead, tail = _flat_halo(K, pad, W)
    assert KK == K * K and Lp == HW + lead + tail

    # Per-kx column validity: output column x is valid for tap kx iff 0 <= x+kx-pad < W.
    col = jnp.arange(HW, dtype=jnp.int32) % W
    dxs = jnp.arange(K, dtype=jnp.int32)[:, None] - pad
    valid = ((col[None, :] + dxs) >= 0) & ((col[None, :] + dxs) < W)
    colmask = valid.astype(jnp.float32).reshape(K, 1, HW)

    flops = 2 * G * N * KK * Fout * Cp * HW
    bytes_accessed = (x.size * x.dtype.itemsize + w.size * w.dtype.itemsize
                      + colmask.size * 4 + G * N * Fout * HW * 4)

    # TODO(synk): for very large images, add an H*W tile grid axis with a manually DMA'd
    # halo (pl.ANY + make_async_copy) so per-image blocks stay within v7x's 64 MiB VMEM
    # and N==1 still yields >=2 parallel steps.
    # TODO(synk): on v5e, add pipeline_mode=pl.Buffered(3) to the x BlockSpec to hide DMA
    # issue latency once the grid has many steps.
    return pl.pallas_call(
        _make_conv_gemm_kernel(K, W, HW, pad),
        out_shape=jax.ShapeDtypeStruct((G, N, Fout, HW), jnp.float32),
        grid_spec=pltpu.PrefetchScalarGridSpec(
            num_scalar_prefetch=0,
            grid=(G, N),
            in_specs=[
                pl.BlockSpec((1, 1, Cp, Lp), lambda g, n: (g, n, 0, 0)),
                pl.BlockSpec((1, KK, Fout, Cp), lambda g, n: (g, 0, 0, 0)),   # resident over n
                pl.BlockSpec((K, 1, HW), lambda g, n: (0, 0, 0)),             # resident mask
            ],
            out_specs=pl.BlockSpec((1, 1, Fout, HW), lambda g, n: (g, n, 0, 0)),
        ),
        compiler_params=pltpu.CompilerParams(
            dimension_semantics=("parallel", "parallel"),
            vmem_limit_bytes=_VMEM_LIMIT_BYTES),
        cost_estimate=pl.CostEstimate(flops=int(flops), transcendentals=0,
                                      bytes_accessed=int(bytes_accessed)),
    )(x, w, colmask)


# ------------------------------ glue wrappers -------------------------------

def lowpass_gain(u_lp, g_lp, pad, compute_dtype=jnp.bfloat16):
    """u_lp: (N,C,H,W), g_lp: (F,C,K,K) -> (N,F,H,W) (== conv2d, 'same' padding)."""
    N, C, H, W = u_lp.shape
    F, _, K, _ = g_lp.shape
    HW = H * W
    Cp = _round_up(C, 8)
    lead, tail = _flat_halo(K, pad, W)

    x = u_lp.reshape(N, C, HW).astype(compute_dtype)            # free reshape (stays NCHW)
    x = jnp.pad(x, ((0, 0), (0, Cp - C), (lead, tail)))[None]   # (1, N, Cp, Lp)

    w = jnp.transpose(g_lp, (2, 3, 0, 1)).reshape(K * K, F, C).astype(compute_dtype)
    w = jnp.pad(w, ((0, 0), (0, 0), (0, Cp - C)))[None]         # (1, K*K, F, Cp), tiny

    out = _conv_gain_fused(x, w, K=K, W=W, HW=HW, pad=pad)      # (1, N, F, HW) f32
    return out[0].reshape(N, F, H, W)                           # free reshape, no relayout pass


def bandpass_gain(u_j, g_j, pad, compute_dtype=jnp.bfloat16):
    """u_j: (N,C,6,H,W,2), g_j: (6,F,C,K,K,2) -> (N,F,6,H,W,2) (complex conv per band)."""
    N, C, L, H, W, _ = u_j.shape
    _, F, _, K, _, _ = g_j.shape
    HW = H * W
    C2 = 2 * C
    C2p = _round_up(C2, 8)
    lead, tail = _flat_halo(K, pad, W)

    # (N,C,L,H,W,2) -> (L,N,2,C,H,W): the single unavoidable input relayout (real/imag
    # must become contraction-row blocks; they are interleaved innermost in the source).
    x = jnp.transpose(u_j, (2, 0, 5, 1, 3, 4)).astype(compute_dtype)
    x = x.reshape(L, N, C2, HW)                                  # free merges
    x = jnp.pad(x, ((0, 0), (0, 0), (0, C2p - C2), (lead, tail)))  # (L, N, C2p, Lp)

    # Per-tap fused complex block weight [[w_r, -w_i], [w_i, w_r]] -> (L, K*K, 2F, C2p).
    g = g_j.astype(compute_dtype)
    w_r = jnp.transpose(g[..., 0], (0, 3, 4, 1, 2))              # (L, K, K, F, C)
    w_i = jnp.transpose(g[..., 1], (0, 3, 4, 1, 2))
    wc = jnp.concatenate([
        jnp.concatenate([w_r, -w_i], axis=-1),                   # real-output rows
        jnp.concatenate([w_i, w_r], axis=-1),                    # imag-output rows
    ], axis=3).reshape(L, K * K, 2 * F, C2)
    wc = jnp.pad(wc, ((0, 0), (0, 0), (0, 0), (0, C2p - C2)))

    out = _conv_gain_fused(x, wc, K=K, W=W, HW=HW, pad=pad)      # (L, N, 2F, HW) f32
    out = out.reshape(L, N, 2, F, H, W)                          # free splits
    # TODO(synk): this transpose is the one remaining output relayout pass; it is forced by
    # the PyTorch (N,F,6,H,W,2) layout's size-2 minor dim, which cannot be stored
    # lane-densely from the kernel.
    return jnp.transpose(out, (1, 3, 0, 4, 5, 2))                # (N, F, 6, H, W, 2)


# ----------------------------- module wrapper -------------------------------

class WaveGainLayerPallas:
    """JAX/Pallas port of WaveGainLayer forward (deterministic synthetic params)."""

    def __init__(self, C, F, lp_size=3, bp_sizes=(1,), *, key,
                 compute_dtype=jnp.bfloat16):
        self.C, self.F = C, F
        self.lp_size = lp_size
        self.bp_sizes = bp_sizes
        self.J = len(bp_sizes)
        self.compute_dtype = compute_dtype
        lp_scales = [1, 2, 4, 8]
        bp_scales = [2, 4, 8, 16]
        keys = jax.random.split(key, 1 + self.J)

        if lp_size is None or lp_size == 0:
            self.lp_pad = None
            self.g_lp = None
        else:
            self.lp_pad = (lp_size - 1) // 2
            fan_in = C * lp_size * lp_size
            fan_out = F * lp_size * lp_size
            std = lp_scales[self.J - 1] * math.sqrt(2.0 / (fan_in + fan_out))
            a = math.sqrt(3.0) * std
            self.g_lp = jax.random.uniform(keys[0], (F, C, lp_size, lp_size),
                                           jnp.float32, -a, a)

        self.bp_pad = []
        self.g = []
        for j, s in enumerate(bp_sizes):
            if s is None or s == 0:
                self.bp_pad.append(None)
                self.g.append(None)
            else:
                self.bp_pad.append((s - 1) // 2)
                fan_in = C * s * s
                fan_out = F * s * s
                std = bp_scales[j] * math.sqrt(2.0 / (fan_in + fan_out))
                a = math.sqrt(3.0) * std
                self.g.append(jax.random.uniform(keys[1 + j], (6, F, C, s, s, 2),
                                                 jnp.float32, -a, a))
        # TODO(synk): get_reg()/ComplexL1 is training-time regularization (custom backward),
        # not part of the forward pass; not implemented here.

    def __call__(self, coeffs):
        u_lp, u = coeffs
        assert len(u) == self.J, "Number of bandpasses must match number of filters"
        if self.g_lp is None:
            v_lp = jnp.zeros_like(u_lp)
        else:
            v_lp = lowpass_gain(u_lp, self.g_lp, self.lp_pad, self.compute_dtype)
        v = []
        for j in range(self.J):
            if self.g[j] is None:
                v.append(jnp.zeros_like(u[j]))
            else:
                v.append(bandpass_gain(u[j], self.g[j], self.bp_pad[j],
                                       self.compute_dtype))
        return v_lp, v


# --------------------------------- checks ----------------------------------

def _ref_conv2d(x, w, pad):
    return lax.conv_general_dilated(
        x, w, window_strides=(1, 1), padding=[(pad, pad), (pad, pad)],
        dimension_numbers=('NCHW', 'OIHW', 'NCHW'))


def _ref_forward(u_lp, u1, g_lp, g0, lp_pad, bp_pad0):
    ref_lp = _ref_conv2d(u_lp, g_lp, lp_pad)
    bands = []
    for l in range(6):
        ur, ui = u1[:, :, l, :, :, 0], u1[:, :, l, :, :, 1]
        gr, gi = g0[l, ..., 0], g0[l, ..., 1]
        vr = _ref_conv2d(ur, gr, bp_pad0) - _ref_conv2d(ui, gi, bp_pad0)
        vi = _ref_conv2d(ur, gi, bp_pad0) + _ref_conv2d(ui, gr, bp_pad0)
        bands.append(jnp.stack((vr, vi), axis=-1))
    return ref_lp, jnp.stack(bands, axis=2)


if __name__ == "__main__":
    key = jax.random.PRNGKey(0)
    k_param, k_lp, k_bp = jax.random.split(key, 3)

    C, F = 4, 6
    N, H, W = 2, 16, 16
    H2, W2 = 8, 8

    layer = WaveGainLayerPallas(C, F, lp_size=3, bp_sizes=(1,), key=k_param)

    u_lp = jax.random.normal(k_lp, (N, C, H, W), jnp.float32)
    u1 = jax.random.normal(k_bp, (N, C, 6, H2, W2, 2), jnp.float32)

    @jax.jit
    def forward(lp, bp):
        return layer((lp, [bp]))

    v_lp, v = forward(u_lp, u1)
    v_lp = jax.block_until_ready(v_lp)
    v0 = jax.block_until_ready(v[0])

    assert v_lp.shape == (N, F, H, W), v_lp.shape
    assert v0.shape == (N, F, 6, H2, W2, 2), v0.shape

    # (a) tight check vs. a pure-JAX reference using the same bf16-rounded operands
    #     (validates the shifted-tap GEMM structure / indexing / edge masking exactly).
    bf = lambda a: a.astype(jnp.bfloat16).astype(jnp.float32)
    ref_lp_bf, ref_bp_bf = _ref_forward(bf(u_lp), bf(u1), bf(layer.g_lp),
                                        bf(layer.g[0]), layer.lp_pad, layer.bp_pad[0])
    assert jnp.allclose(v_lp, ref_lp_bf, atol=2e-3, rtol=2e-3)
    assert jnp.allclose(v0, ref_bp_bf, atol=2e-3, rtol=2e-3)

    # (b) loose check vs. the full-f32 reference (bf16-operand / f32-accumulate approx).
    ref_lp_f32, ref_bp_f32 = _ref_forward(u_lp, u1, layer.g_lp, layer.g[0],
                                          layer.lp_pad, layer.bp_pad[0])
    rel_lp = jnp.linalg.norm(v_lp - ref_lp_f32) / jnp.linalg.norm(ref_lp_f32)
    rel_bp = jnp.linalg.norm(v0 - ref_bp_f32) / jnp.linalg.norm(ref_bp_f32)
    assert float(rel_lp) < 2e-2, float(rel_lp)
    assert float(rel_bp) < 2e-2, float(rel_bp)

    print("KERNEL_OK")
</pallas_src>

<mosaic_0001>
module attributes {stable_mosaic.version = 11 : i64} {
  func.func @kernel(%arg0: i32, %arg1: i32, %arg2: memref<1x1x8x64xbf16, #tpu.memory_space<vmem>>, %arg3: memref<1x1x12x8xbf16, #tpu.memory_space<vmem>>, %arg4: memref<1x1x64xf32, #tpu.memory_space<vmem>>, %arg5: memref<1x1x12x64xf32, #tpu.memory_space<vmem>>) attributes {dimension_semantics = [#tpu.dimension_semantics<parallel>, #tpu.dimension_semantics<parallel>], iteration_bounds = array<i64: 6, 2>, scalar_prefetch = 0 : i64, scratch_operands = 0 : i64, tpu.core_type = #tpu.core_type<tc>, window_params = [{transform_indices = @transform_0, window_bounds = array<i64: 1, 1, 8, 64>}, {transform_indices = @transform_1, window_bounds = array<i64: 1, 1, 12, 8>}, {pipeline_mode = #tpu.pipeline_mode<synchronous>, transform_indices = @transform_2, window_bounds = array<i64: 1, 1, 64>}, {transform_indices = @transform_3, window_bounds = array<i64: 1, 1, 12, 64>}]} {
    %c0 = arith.constant 0 : index
    %c0_0 = arith.constant 0 : index
    %c0_1 = arith.constant 0 : index
    %c0_2 = arith.constant 0 : index
    %0 = vector.load %arg2[%c0, %c0_0, %c0_1, %c0_2] : memref<1x1x8x64xbf16, #tpu.memory_space<vmem>>, vector<1x1x8x64xbf16>
    %1 = vector.shape_cast %0 : vector<1x1x8x64xbf16> to vector<8x64xbf16>
    %c0_3 = arith.constant 0 : index
    %c0_4 = arith.constant 0 : index
    %c0_5 = arith.constant 0 : index
    %c0_6 = arith.constant 0 : index
    %2 = vector.load %arg3[%c0_3, %c0_4, %c0_5, %c0_6] : memref<1x1x12x8xbf16, #tpu.memory_space<vmem>>, vector<1x1x12x8xbf16>
    %3 = vector.shape_cast %2 : vector<1x1x12x8xbf16> to vector<12x8xbf16>
    %cst = arith.constant dense<0.000000e+00> : vector<12x64xf32>
    %4 = tpu.matmul %3, %1, %cst {dimension_numbers = #tpu.dot_dimension_numbers<[1], [0], [0], [1], [0, 0, 1, 1], [], []>} : vector<12x8xbf16>, vector<8x64xbf16>, vector<12x64xf32> -> vector<12x64xf32>
    %c0_7 = arith.constant 0 : index
    %c0_8 = arith.constant 0 : index
    %c0_9 = arith.constant 0 : index
    %c0_10 = arith.constant 0 : index
    %5 = vector.load %arg5[%c0_7, %c0_8, %c0_9, %c0_10] : memref<1x1x12x64xf32, #tpu.memory_space<vmem>>, vector<1x1x12x64xf32>
    %6 = vector.shape_cast %5 : vector<1x1x12x64xf32> to vector<12x64xf32>
    %7 = vector.shape_cast %4 : vector<12x64xf32> to vector<1x1x12x64xf32>
    tpu.vector_store %arg5[%c0_7, %c0_8, %c0_9, %c0_10], %7 {strides = array<i32>} : memref<1x1x12x64xf32, #tpu.memory_space<vmem>>, vector<1x1x12x64xf32>,
    return
  }
  func.func @transform_0(%arg0: i32, %arg1: i32) -> (i32, i32, i32, i32) {
    %c0_i32 = arith.constant 0 : i32
    %c0_i32_0 = arith.constant 0 : i32
    %c0_i32_1 = arith.constant 0 : i32
    return %arg0, %arg1, %c0_i32, %c0_i32_0 : i32, i32, i32, i32
  }
  func.func @transform_1(%arg0: i32, %arg1: i32) -> (i32, i32, i32, i32) {
    %c0_i32 = arith.constant 0 : i32
    %c0_i32_0 = arith.constant 0 : i32
    %c0_i32_1 = arith.constant 0 : i32
    %c0_i32_2 = arith.constant 0 : i32
    return %arg0, %c0_i32, %c0_i32_0, %c0_i32_1 : i32, i32, i32, i32
  }
  func.func @transform_2(%arg0: i32, %arg1: i32) -> (i32, i32, i32) {
    %c0_i32 = arith.constant 0 : i32
    %c0_i32_0 = arith.constant 0 : i32
    %c0_i32_1 = arith.constant 0 : i32
    %c0_i32_2 = arith.constant 0 : i32
    return %c0_i32, %c0_i32_0, %c0_i32_1 : i32, i32, i32
  }
  func.func @transform_3(%arg0: i32, %arg1: i32) -> (i32, i32, i32, i32) {
    %c0_i32 = arith.constant 0 : i32
    %c0_i32_0 = arith.constant 0 : i32
    %c0_i32_1 = arith.constant 0 : i32
    return %arg0, %arg1, %c0_i32, %c0_i32_0 : i32, i32, i32, i32
  }
}

module attributes {stable_mosaic.version = 11 : i64} {
  func.func @kernel(%arg0: i32, %arg1: i32, %arg2: memref<1x1x8x290xbf16, #tpu.memory_space<vmem>>, %arg3: memref<1x9x6x8xbf16, #tpu.memory_space<vmem>>, %arg4: memref<3x1x256xf32, #tpu.memory_space<vmem>>, %arg5: memref<1x1x6x256xf32, #tpu.memory_space<vmem>>) attributes {dimension_semantics = [#tpu.dimension_semantics<parallel>, #tpu.dimension_semantics<parallel>], iteration_bounds = array<i64: 1, 2>, scalar_prefetch = 0 : i64, scratch_operands = 0 : i64, tpu.core_type = #tpu.core_type<tc>, window_params = [{transform_indices = @transform_0, window_bounds = array<i64: 1, 1, 8, 290>}, {transform_indices = @transform_1, window_bounds = array<i64: 1, 9, 6, 8>}, {pipeline_mode = #tpu.pipeline_mode<synchronous>, transform_indices = @transform_2, window_bounds = array<i64: 3, 1, 256>}, {transform_indices = @transform_3, window_bounds = array<i64: 1, 1, 6, 256>}]} {
    %c0 = arith.constant 0 : index
    %c0_0 = arith.constant 0 : index
    %c0_1 = arith.constant 0 : index
    %c0_2 = arith.constant 0 : index
    %0 = vector.load %arg2[%c0, %c0_0, %c0_1, %c0_2] : memref<1x1x8x290xbf16, #tpu.memory_space<vmem>>, vector<1x1x8x256xbf16>
    %1 = vector.shape_cast %0 : vector<1x1x8x256xbf16> to vector<8x256xbf16>
    %c0_3 = arith.constant 0 : index
    %c0_4 = arith.constant 0 : index
    %c0_5 = arith.constant 0 : index
    %c0_6 = arith.constant 0 : index
    %2 = vector.load %arg3[%c0_3, %c0_4, %c0_5, %c0_6] : memref<1x9x6x8xbf16, #tpu.memory_space<vmem>>, vector<1x1x6x8xbf16>
    %3 = vector.shape_cast %2 : vector<1x1x6x8xbf16> to vector<6x8xbf16>
    %cst = arith.constant dense<0.000000e+00> : vector<6x256xf32>
    %4 = tpu.matmul %3, %1, %cst {dimension_numbers = #tpu.dot_dimension_numbers<[1], [0], [0], [1], [0, 0, 1, 1], [], []>} : vector<6x8xbf16>, vector<8x256xbf16>, vector<6x256xf32> -> vector<6x256xf32>
    %c0_7 = arith.constant 0 : index
    %c0_8 = arith.constant 0 : index
    %c0_9 = arith.constant 0 : index
    %5 = vector.load %arg4[%c0_7, %c0_8, %c0_9] : memref<3x1x256xf32, #tpu.memory_space<vmem>>, vector<1x1x256xf32>
    %6 = vector.shape_cast %5 : vector<1x1x256xf32> to vector<1x256xf32>
    %7 = vector.broadcast %6 : vector<1x256xf32> to vector<6x256xf32>
    %8 = arith.mulf %4, %7 : vector<6x256xf32>
    %c0_10 = arith.constant 0 : index
    %c0_11 = arith.constant 0 : index
    %c0_12 = arith.constant 0 : index
    %c0_13 = arith.constant 0 : index
    %9 = vector.load %arg5[%c0_10, %c0_11, %c0_12, %c0_13] : memref<1x1x6x256xf32, #tpu.memory_space<vmem>>, vector<1x1x6x256xf32>
    %10 = vector.shape_cast %9 : vector<1x1x6x256xf32> to vector<6x256xf32>
    %11 = vector.shape_cast %8 : vector<6x256xf32> to vector<1x1x6x256xf32>
    tpu.vector_store %arg5[%c0_10, %c0_11, %c0_12, %c0_13], %11 {strides = array<i32>} : memref<1x1x6x256xf32, #tpu.memory_space<vmem>>, vector<1x1x6x256xf32>,
    %c0_14 = arith.constant 0 : index
    %c0_15 = arith.constant 0 : index
    %c0_16 = arith.constant 0 : index
    %c1 = arith.constant 1 : index
    %12 = vector.load %arg2[%c0_14, %c0_15, %c0_16, %c1] : memref<1x1x8x290xbf16, #tpu.memory_space<vmem>>, vector<1x1x8x256xbf16>
    %13 = vector.shape_cast %12 : vector<1x1x8x256xbf16> to vector<8x256xbf16>
    %c0_17 = arith.constant 0 : index
    %c1_18 = arith.constant 1 : index
    %c0_19 = arith.constant 0 : index
    %c0_20 = arith.constant 0 : index
    %14 = vector.load %arg3[%c0_17, %c1_18, %c0_19, %c0_20] : memref<1x9x6x8xbf16, #tpu.memory_space<vmem>>, vector<1x1x6x8xbf16>
    %15 = vector.shape_cast %14 : vector<1x1x6x8xbf16> to vector<6x8xbf16>
    %cst_21 = arith.constant dense<0.000000e+00> : vector<6x256xf32>
    %16 = tpu.matmul %15, %13, %cst_21 {dimension_numbers = #tpu.dot_dimension_numbers<[1], [0], [0], [1], [0, 0, 1, 1], [], []>} : vector<6x8xbf16>, vector<8x256xbf16>, vector<6x256xf32> -> vector<6x256xf32>
    %c0_22 = arith.constant 0 : index
    %c0_23 = arith.constant 0 : index
    %c0_24 = arith.constant 0 : index
    %c0_25 = arith.constant 0 : index
    %17 = vector.load %arg5[%c0_22, %c0_23, %c0_24, %c0_25] : memref<1x1x6x256xf32, #tpu.memory_space<vmem>>, vector<1x1x6x256xf32>
    %18 = vector.shape_cast %17 : vector<1x1x6x256xf32> to vector<6x256xf32>
    %19 = arith.addf %18, %16 : vector<6x256xf32>
    %c0_26 = arith.constant 0 : index
    %c0_27 = arith.constant 0 : index
    %c0_28 = arith.constant 0 : index
    %c0_29 = arith.constant 0 : index
    %20 = vector.load %arg5[%c0_26, %c0_27, %c0_28, %c0_29] : memref<1x1x6x256xf32, #tpu.memory_space<vmem>>, vector<1x1x6x256xf32>
    %21 = vector.shape_cast %20 : vector<1x1x6x256xf32> to vector<6x256xf32>
    %22 = vector.shape_cast %19 : vector<6x256xf32> to vector<1x1x6x256xf32>
    tpu.vector_store %arg5[%c0_26, %c0_27, %c0_28, %c0_29], %22 {strides = array<i32>} : memref<1x1x6x256xf32, #tpu.memory_space<vmem>>, vector<1x1x6x256xf32>,
    %c0_30 = arith.constant 0 : index
    %c0_31 = arith.constant 0 : index
    %c0_32 = arith.constant 0 : index
    %c2 = arith.constant 2 : index
    %23 = vector.load %arg2[%c0_30, %c0_31, %c0_32, %c2] : memref<1x1x8x290xbf16, #tpu.memory_space<vmem>>, vector<1x1x8x256xbf16>
    %24 = vector.shape_cast %23 : vector<1x1x8x256xbf16> to vector<8x256xbf16>
    %c0_33 = arith.constant 0 : index
    %c2_34 = arith.constant 2 : index
    %c0_35 = arith.constant 0 : index
    %c0_36 = arith.constant 0 : index
    %25 = vector.load %arg3[%c0_33, %c2_34, %c0_35, %c0_36] : memref<1x9x6x8xbf16, #tpu.memory_space<vmem>>, vector<1x1x6x8xbf16>
    %26 = vector.shape_cast %25 : vector<1x1x6x8xbf16> to vector<6x8xbf16>
    %cst_37 = arith.constant dense<0.000000e+00> : vector<6x256xf32>
    %27 = tpu.matmul %26, %24, %cst_37 {dimension_numbers = #tpu.dot_dimension_numbers<[1], [0], [0], [1], [0, 0, 1, 1], [], []>} : vector<6x8xbf16>, vector<8x256xbf16>, vector<6x256xf32> -> vector<6x256xf32>
    %c2_38 = arith.constant 2 : index
    %c0_39 = arith.constant 0 : index
    %c0_40 = arith.constant 0 : index
    %28 = vector.load %arg4[%c2_38, %c0_39, %c0_40] : memref<3x1x256xf32, #tpu.memory_space<vmem>>, vector<1x1x256xf32>
    %29 = vector.shape_cast %28 : vector<1x1x256xf32> to vector<1x256xf32>
    %30 = vector.broadcast %29 : vector<1x256xf32> to vector<6x256xf32>
    %31 = arith.mulf %27, %30 : vector<6x256xf32>
    %c0_41 = arith.constant 0 : index
    %c0_42 = arith.constant 0 : index
    %c0_43 = arith.constant 0 : index
    %c0_44 = arith.constant 0 : index
    %32 = vector.load %arg5[%c0_41, %c0_42, %c0_43, %c0_44] : memref<1x1x6x256xf32, #tpu.memory_space<vmem>>, vector<1x1x6x256xf32>
    %33 = vector.shape_cast %32 : vector<1x1x6x256xf32> to vector<6x256xf32>
    %34 = arith.addf %33, %31 : vector<6x256xf32>
    %c0_45 = arith.constant 0 : index
    %c0_46 = arith.constant 0 : index
    %c0_47 = arith.constant 0 : index
    %c0_48 = arith.constant 0 : index
    %35 = vector.load %arg5[%c0_45, %c0_46, %c0_47, %c0_48] : memref<1x1x6x256xf32, #tpu.memory_space<vmem>>, vector<1x1x6x256xf32>
    %36 = vector.shape_cast %35 : vector<1x1x6x256xf32> to vector<6x256xf32>
    %37 = vector.shape_cast %34 : vector<6x256xf32> to vector<1x1x6x256xf32>
    tpu.vector_store %arg5[%c0_45, %c0_46, %c0_47, %c0_48], %37 {strides = array<i32>} : memref<1x1x6x256xf32, #tpu.memory_space<vmem>>, vector<1x1x6x256xf32>,
    %c0_49 = arith.constant 0 : index
    %c0_50 = arith.constant 0 : index
    %c0_51 = arith.constant 0 : index
    %c16 = arith.constant 16 : index
    %38 = vector.load %arg2[%c0_49, %c0_50, %c0_51, %c16] : memref<1x1x8x290xbf16, #tpu.memory_space<vmem>>, vector<1x1x8x256xbf16>
    %39 = vector.shape_cast %38 : vector<1x1x8x256xbf16> to vector<8x256xbf16>
    %c0_52 = arith.constant 0 : index
    %c3 = arith.constant 3 : index
    %c0_53 = arith.constant 0 : index
    %c0_54 = arith.constant 0 : index
    %40 = vector.load %arg3[%c0_52, %c3, %c0_53, %c0_54] : memref<1x9x6x8xbf16, #tpu.memory_space<vmem>>, vector<1x1x6x8xbf16>
    %41 = vector.shape_cast %40 : vector<1x1x6x8xbf16> to vector<6x8xbf16>
    %cst_55 = arith.constant dense<0.000000e+00> : vector<6x256xf32>
    %42 = tpu.matmul %41, %39, %cst_55 {dimension_numbers = #tpu.dot_dimension_numbers<[1], [0], [0], [1], [0, 0, 1, 1], [], []>} : vector<6x8xbf16>, vector<8x256xbf16>, vector<6x256xf32> -> vector<6x256xf32>
    %c0_56 = arith.constant 0 : index
    %c0_57 = arith.constant 0 : index
    %c0_58 = arith.constant 0 : index
    %43 = vector.load %arg4[%c0_56, %c0_57, %c0_58] : memref<3x1x256xf32, #tpu.memory_space<vmem>>, vector<1x1x256xf32>
    %44 = vector.shape_cast %43 : vector<1x1x256xf32> to vector<1x256xf32>
    %45 = vector.broadcast %44 : vector<1x256xf32> to vector<6x256xf32>
    %46 = arith.mulf %42, %45 : vector<6x256xf32>
    %c0_59 = arith.constant 0 : index
    %c0_60 = arith.constant 0 : index
    %c0_61 = arith.constant 0 : index
    %c0_62 = arith.constant 0 : index
    %47 = vector.load %arg5[%c0_59, %c0_60, %c0_61, %c0_62] : memref<1x1x6x256xf32, #tpu.memory_space<vmem>>, vector<1x1x6x256xf32>
    %48 = vector.shape_cast %47 : vector<1x1x6x256xf32> to vector<6x256xf32>
    %49 = arith.addf %48, %46 : vector<6x256xf32>
    %c0_63 = arith.constant 0 : index
    %c0_64 = arith.constant 0 : index
    %c0_65 = arith.constant 0 : index
    %c0_66 = arith.constant 0 : index
    %50 = vector.load %arg5[%c0_63, %c0_64, %c0_65, %c0_66] : memref<1x1x6x256xf32, #tpu.memory_space<vmem>>, vector<1x1x6x256xf32>
    %51 = vector.shape_cast %50 : vector<1x1x6x256xf32> to vector<6x256xf32>
    %52 = vector.shape_cast %49 : vector<6x256xf32> to vector<1x1x6x256xf32>
    tpu.vector_store %arg5[%c0_63, %c0_64, %c0_65, %c0_66], %52 {strides = array<i32>} : memref<1x1x6x256xf32, #tpu.memory_space<vmem>>, vector<1x1x6x256xf32>,
    %c0_67 = arith.constant 0 : index
    %c0_68 = arith.constant 0 : index
    %c0_69 = arith.constant 0 : index
    %c17 = arith.constant 17 : index
    %53 = vector.load %arg2[%c0_67, %c0_68, %c0_69, %c17] : memref<1x1x8x290xbf16, #tpu.memory_space<vmem>>, vector<1x1x8x256xbf16>
    %54 = vector.shape_cast %53 : vector<1x1x8x256xbf16> to vector<8x256xbf16>
    %c0_70 = arith.constant 0 : index
    %c4 = arith.constant 4 : index
    %c0_71 = arith.constant 0 : index
    %c0_72 = arith.constant 0 : index
    %55 = vector.load %arg3[%c0_70, %c4, %c0_71, %c0_72] : memref<1x9x6x8xbf16, #tpu.memory_space<vmem>>, vector<1x1x6x8xbf16>
    %56 = vector.shape_cast %55 : vector<1x1x6x8xbf16> to vector<6x8xbf16>
    %cst_73 = arith.constant dense<0.000000e+00> : vector<6x256xf32>
    %57 = tpu.matmul %56, %54, %cst_73 {dimension_numbers = #tpu.dot_dimension_numbers<[1], [0], [0], [1], [0, 0, 1, 1], [], []>} : vector<6x8xbf16>, vector<8x256xbf16>, vector<6x256xf32> -> vector<6x256xf32>
    %c0_74 = arith.constant 0 : index
    %c0_75 = arith.constant 0 : index
    %c0_76 = arith.constant 0 : index
    %c0_77 = arith.constant 0 : index
    %58 = vector.load %arg5[%c0_74, %c0_75, %c0_76, %c0_77] : memref<1x1x6x256xf32, #tpu.memory_space<vmem>>, vector<1x1x6x256xf32>
    %59 = vector.shape_cast %58 : vector<1x1x6x256xf32> to vector<6x256xf32>
    %60 = arith.addf %59, %57 : vector<6x256xf32>
    %c0_78 = arith.constant 0 : index
    %c0_79 = arith.constant 0 : index
    %c0_80 = arith.constant 0 : index
    %c0_81 = arith.constant 0 : index
    %61 = vector.load %arg5[%c0_78, %c0_79, %c0_80, %c0_81] : memref<1x1x6x256xf32, #tpu.memory_space<vmem>>, vector<1x1x6x256xf32>
    %62 = vector.shape_cast %61 : vector<1x1x6x256xf32> to vector<6x256xf32>
    %63 = vector.shape_cast %60 : vector<6x256xf32> to vector<1x1x6x256xf32>
    tpu.vector_store %arg5[%c0_78, %c0_79, %c0_80, %c0_81], %63 {strides = array<i32>} : memref<1x1x6x256xf32, #tpu.memory_space<vmem>>, vector<1x1x6x256xf32>,
    %c0_82 = arith.constant 0 : index
    %c0_83 = arith.constant 0 : index
    %c0_84 = arith.constant 0 : index
    %c18 = arith.constant 18 : index
    %64 = vector.load %arg2[%c0_82, %c0_83, %c0_84, %c18] : memref<1x1x8x290xbf16, #tpu.memory_space<vmem>>, vector<1x1x8x256xbf16>
    %65 = vector.shape_cast %64 : vector<1x1x8x256xbf16> to vector<8x256xbf16>
    %c0_85 = arith.constant 0 : index
    %c5 = arith.constant 5 : index
    %c0_86 = arith.constant 0 : index
    %c0_87 = arith.constant 0 : index
    %66 = vector.load %arg3[%c0_85, %c5, %c0_86, %c0_87] : memref<1x9x6x8xbf16, #tpu.memory_space<vmem>>, vector<1x1x6x8xbf16>
    %67 = vector.shape_cast %66 : vector<1x1x6x8xbf16> to vector<6x8xbf16>
    %cst_88 = arith.constant dense<0.000000e+00> : vector<6x256xf32>
    %68 = tpu.matmul %67, %65, %cst_88 {dimension_numbers = #tpu.dot_dimension_numbers<[1], [0], [0], [1], [0, 0, 1, 1], [], []>} : vector<6x8xbf16>, vector<8x256xbf16>, vector<6x256xf32> -> vector<6x256xf32>
    %c2_89 = arith.constant 2 : index
    %c0_90 = arith.constant 0 : index
    %c0_91 = arith.constant 0 : index
    %69 = vector.load %arg4[%c2_89, %c0_90, %c0_91] : memref<3x1x256xf32, #tpu.memory_space<vmem>>, vector<1x1x256xf32>
    %70 = vector.shape_cast %69 : vector<1x1x256xf32> to vector<1x256xf32>
    %71 = vector.broadcast %70 : vector<1x256xf32> to vector<6x256xf32>
    %72 = arith.mulf %68, %71 : vector<6x256xf32>
    %c0_92 = arith.constant 0 : index
    %c0_93 = arith.constant 0 : index
    %c0_94 = arith.constant 0 : index
    %c0_95 = arith.constant 0 : index
    %73 = vector.load %arg5[%c0_92, %c0_93, %c0_94, %c0_95] : memref<1x1x6x256xf32, #tpu.memory_space<vmem>>, vector<1x1x6x256xf32>
    %74 = vector.shape_cast %73 : vector<1x1x6x256xf32> to vector<6x256xf32>
    %75 = arith.addf %74, %72 : vector<6x256xf32>
    %c0_96 = arith.constant 0 : index
    %c0_97 = arith.constant 0 : index
    %c0_98 = arith.constant 0 : index
    %c0_99 = arith.constant 0 : index
    %76 = vector.load %arg5[%c0_96, %c0_97, %c0_98, %c0_99] : memref<1x1x6x256xf32, #tpu.memory_space<vmem>>, vector<1x1x6x256xf32>
    %77 = vector.shape_cast %76 : vector<1x1x6x256xf32> to vector<6x256xf32>
    %78 = vector.shape_cast %75 : vector<6x256xf32> to vector<1x1x6x256xf32>
    tpu.vector_store %arg5[%c0_96, %c0_97, %c0_98, %c0_99], %78 {strides = array<i32>} : memref<1x1x6x256xf32, #tpu.memory_space<vmem>>, vector<1x1x6x256xf32>,
    %c0_100 = arith.constant 0 : index
    %c0_101 = arith.constant 0 : index
    %c0_102 = arith.constant 0 : index
    %c32 = arith.constant 32 : index
    %79 = vector.load %arg2[%c0_100, %c0_101, %c0_102, %c32] : memref<1x1x8x290xbf16, #tpu.memory_space<vmem>>, vector<1x1x8x256xbf16>
    %80 = vector.shape_cast %79 : vector<1x1x8x256xbf16> to vector<8x256xbf16>
    %c0_103 = arith.constant 0 : index
    %c6 = arith.constant 6 : index
    %c0_104 = arith.constant 0 : index
    %c0_105 = arith.constant 0 : index
    %81 = vector.load %arg3[%c0_103, %c6, %c0_104, %c0_105] : memref<1x9x6x8xbf16, #tpu.memory_space<vmem>>, vector<1x1x6x8xbf16>
    %82 = vector.shape_cast %81 : vector<1x1x6x8xbf16> to vector<6x8xbf16>
    %cst_106 = arith.constant dense<0.000000e+00> : vector<6x256xf32>
    %83 = tpu.matmul %82, %80, %cst_106 {dimension_numbers = #tpu.dot_dimension_numbers<[1], [0], [0], [1], [0, 0, 1, 1], [], []>} : vector<6x8xbf16>, vector<8x256xbf16>, vector<6x256xf32> -> vector<6x256xf32>
    %c0_107 = arith.constant 0 : index
    %c0_108 = arith.constant 0 : index
    %c0_109 = arith.constant 0 : index
    %84 = vector.load %arg4[%c0_107, %c0_108, %c0_109] : memref<3x1x256xf32, #tpu.memory_space<vmem>>, vector<1x1x256xf32>
    %85 = vector.shape_cast %84 : vector<1x1x256xf32> to vector<1x256xf32>
    %86 = vector.broadcast %85 : vector<1x256xf32> to vector<6x256xf32>
    %87 = arith.mulf %83, %86 : vector<6x256xf32>
    %c0_110 = arith.constant 0 : index
    %c0_111 = arith.constant 0 : index
    %c0_112 = arith.constant 0 : index
    %c0_113 = arith.constant 0 : index
    %88 = vector.load %arg5[%c0_110, %c0_111, %c0_112, %c0_113] : memref<1x1x6x256xf32, #tpu.memory_space<vmem>>, vector<1x1x6x256xf32>
    %89 = vector.shape_cast %88 : vector<1x1x6x256xf32> to vector<6x256xf32>
    %90 = arith.addf %89, %87 : vector<6x256xf32>
    %c0_114 = arith.constant 0 : index
    %c0_115 = arith.constant 0 : index
    %c0_116 = arith.constant 0 : index
    %c0_117 = arith.constant 0 : index
    %91 = vector.load %arg5[%c0_114, %c0_115, %c0_116, %c0_117] : memref<1x1x6x256xf32, #tpu.memory_space<vmem>>, vector<1x1x6x256xf32>
    %92 = vector.shape_cast %91 : vector<1x1x6x256xf32> to vector<6x256xf32>
    %93 = vector.shape_cast %90 : vector<6x256xf32> to vector<1x1x6x256xf32>
    tpu.vector_store %arg5[%c0_114, %c0_115, %c0_116, %c0_117], %93 {strides = array<i32>} : memref<1x1x6x256xf32, #tpu.memory_space<vmem>>, vector<1x1x6x256xf32>,
    %c0_118 = arith.constant 0 : index
    %c0_119 = arith.constant 0 : index
    %c0_120 = arith.constant 0 : index
    %c33 = arith.constant 33 : index
    %94 = vector.load %arg2[%c0_118, %c0_119, %c0_120, %c33] : memref<1x1x8x290xbf16, #tpu.memory_space<vmem>>, vector<1x1x8x256xbf16>
    %95 = vector.shape_cast %94 : vector<1x1x8x256xbf16> to vector<8x256xbf16>
    %c0_121 = arith.constant 0 : index
    %c7 = arith.constant 7 : index
    %c0_122 = arith.constant 0 : index
    %c0_123 = arith.constant 0 : index
    %96 = vector.load %arg3[%c0_121, %c7, %c0_122, %c0_123] : memref<1x9x6x8xbf16, #tpu.memory_space<vmem>>, vector<1x1x6x8xbf16>
    %97 = vector.shape_cast %96 : vector<1x1x6x8xbf16> to vector<6x8xbf16>
    %cst_124 = arith.constant dense<0.000000e+00> : vector<6x256xf32>
    %98 = tpu.matmul %97, %95, %cst_124 {dimension_numbers = #tpu.dot_dimension_numbers<[1], [0], [0], [1], [0, 0, 1, 1], [], []>} : vector<6x8xbf16>, vector<8x256xbf16>, vector<6x256xf32> -> vector<6x256xf32>
    %c0_125 = arith.constant 0 : index
    %c0_126 = arith.constant 0 : index
    %c0_127 = arith.constant 0 : index
    %c0_128 = arith.constant 0 : index
    %99 = vector.load %arg5[%c0_125, %c0_126, %c0_127, %c0_128] : memref<1x1x6x256xf32, #tpu.memory_space<vmem>>, vector<1x1x6x256xf32>
    %100 = vector.shape_cast %99 : vector<1x1x6x256xf32> to vector<6x256xf32>
    %101 = arith.addf %100, %98 : vector<6x256xf32>
    %c0_129 = arith.constant 0 : index
    %c0_130 = arith.constant 0 : index
    %c0_131 = arith.constant 0 : index
    %c0_132 = arith.constant 0 : index
    %102 = vector.load %arg5[%c0_129, %c0_130, %c0_131, %c0_132] : memref<1x1x6x256xf32, #tpu.memory_space<vmem>>, vector<1x1x6x256xf32>
    %103 = vector.shape_cast %102 : vector<1x1x6x256xf32> to vector<6x256xf32>
    %104 = vector.shape_cast %101 : vector<6x256xf32> to vector<1x1x6x256xf32>
    tpu.vector_store %arg5[%c0_129, %c0_130, %c0_131, %c0_132], %104 {strides = array<i32>} : memref<1x1x6x256xf32, #tpu.memory_space<vmem>>, vector<1x1x6x256xf32>,
    %c0_133 = arith.constant 0 : index
    %c0_134 = arith.constant 0 : index
    %c0_135 = arith.constant 0 : index
    %c34 = arith.constant 34 : index
    %105 = vector.load %arg2[%c0_133, %c0_134, %c0_135, %c34] : memref<1x1x8x290xbf16, #tpu.memory_space<vmem>>, vector<1x1x8x256xbf16>
    %106 = vector.shape_cast %105 : vector<1x1x8x256xbf16> to vector<8x256xbf16>
    %c0_136 = arith.constant 0 : index
    %c8 = arith.constant 8 : index
    %c0_137 = arith.constant 0 : index
    %c0_138 = arith.constant 0 : index
    %107 = vector.load %arg3[%c0_136, %c8, %c0_137, %c0_138] : memref<1x9x6x8xbf16, #tpu.memory_space<vmem>>, vector<1x1x6x8xbf16>
    %108 = vector.shape_cast %107 : vector<1x1x6x8xbf16> to vector<6x8xbf16>
    %cst_139 = arith.constant dense<0.000000e+00> : vector<6x256xf32>
    %109 = tpu.matmul %108, %106, %cst_139 {dimension_numbers = #tpu.dot_dimension_numbers<[1], [0], [0], [1], [0, 0, 1, 1], [], []>} : vector<6x8xbf16>, vector<8x256xbf16>, vector<6x256xf32> -> vector<6x256xf32>
    %c2_140 = arith.constant 2 : index
    %c0_141 = arith.constant 0 : index
    %c0_142 = arith.constant 0 : index
    %110 = vector.load %arg4[%c2_140, %c0_141, %c0_142] : memref<3x1x256xf32, #tpu.memory_space<vmem>>, vector<1x1x256xf32>
    %111 = vector.shape_cast %110 : vector<1x1x256xf32> to vector<1x256xf32>
    %112 = vector.broadcast %111 : vector<1x256xf32> to vector<6x256xf32>
    %113 = arith.mulf %109, %112 : vector<6x256xf32>
    %c0_143 = arith.constant 0 : index
    %c0_144 = arith.constant 0 : index
    %c0_145 = arith.constant 0 : index
    %c0_146 = arith.constant 0 : index
    %114 = vector.load %arg5[%c0_143, %c0_144, %c0_145, %c0_146] : memref<1x1x6x256xf32, #tpu.memory_space<vmem>>, vector<1x1x6x256xf32>
    %115 = vector.shape_cast %114 : vector<1x1x6x256xf32> to vector<6x256xf32>
    %116 = arith.addf %115, %113 : vector<6x256xf32>
    %c0_147 = arith.constant 0 : index
    %c0_148 = arith.constant 0 : index
    %c0_149 = arith.constant 0 : index
    %c0_150 = arith.constant 0 : index
    %117 = vector.load %arg5[%c0_147, %c0_148, %c0_149, %c0_150] : memref<1x1x6x256xf32, #tpu.memory_space<vmem>>, vector<1x1x6x256xf32>
    %118 = vector.shape_cast %117 : vector<1x1x6x256xf32> to vector<6x256xf32>
    %119 = vector.shape_cast %116 : vector<6x256xf32> to vector<1x1x6x256xf32>
    tpu.vector_store %arg5[%c0_147, %c0_148, %c0_149, %c0_150], %119 {strides = array<i32>} : memref<1x1x6x256xf32, #tpu.memory_space<vmem>>, vector<1x1x6x256xf32>,
    return
  }
  func.func @transform_0(%arg0: i32, %arg1: i32) -> (i32, i32, i32, i32) {
    %c0_i32 = arith.constant 0 : i32
    %c0_i32_0 = arith.constant 0 : i32
    %c0_i32_1 = arith.constant 0 : i32
    return %arg0, %arg1, %c0_i32, %c0_i32_0 : i32, i32, i32, i32
  }
  func.func @transform_1(%arg0: i32, %arg1: i32) -> (i32, i32, i32, i32) {
    %c0_i32 = arith.constant 0 : i32
    %c0_i32_0 = arith.constant 0 : i32
    %c0_i32_1 = arith.constant 0 : i32
    %c0_i32_2 = arith.constant 0 : i32
    return %arg0, %c0_i32, %c0_i32_0, %c0_i32_1 : i32, i32, i32, i32
  }
  func.func @transform_2(%arg0: i32, %arg1: i32) -> (i32, i32, i32) {
    %c0_i32 = arith.constant 0 : i32
    %c0_i32_0 = arith.constant 0 : i32
    %c0_i32_1 = arith.constant 0 : i32
    %c0_i32_2 = arith.constant 0 : i32
    return %c0_i32, %c0_i32_0, %c0_i32_1 : i32, i32, i32
  }
  func.func @transform_3(%arg0: i32, %arg1: i32) -> (i32, i32, i32, i32) {
    %c0_i32 = arith.constant 0 : i32
    %c0_i32_0 = arith.constant 0 : i32
    %c0_i32_1 = arith.constant 0 : i32
    return %arg0, %arg1, %c0_i32, %c0_i32_0 : i32, i32, i32, i32
  }
}

</mosaic_0001>

<llo_original>
// kernel: forward.3
$region0: #{forward.3}
  #allocation0 [shape = 'u32[]', space=smem, size = 0x4, offset = 0x4, fixed_abs, tag = 'smem constant byte address 0x4 - core index']
  #allocation1 [shape = 'u32[144,128]{1,0:T(1,128)}', space=vmem, size = 0x12000, scoped, tag = 'internal scratch']
  %s0 = inlined_call_operand.vmem [shape: bf16[6,2,8,64], index: 0, kind: input, shape index: {}]
  %s1 = inlined_call_operand.vmem [shape: bf16[6,1,12,8], index: 1, kind: input, shape index: {}]
  %s2 = inlined_call_operand.vmem [shape: f32[1,1,64], index: 2, kind: input, shape index: {}]
  %s3 = inlined_call_operand.vmem [shape: f32[6,2,12,64], index: 3, kind: output, shape index: {}]
  %s4 = sld [smem:[#allocation0]]
  $region45: #{forward.3} parent=0
    _
  %s6 = ssub.s32 1, %s4
  %s7 = scalar_select 0, %s6, %s4
  loop: start=0, step=1, limit=14
  $region2: #{forward.3} parent=0 // loop_pre_header
    _
  $region3: #{forward.3} parent=0 // loop_header
    %s9 = sphi 0, %s13
    %p10 = scmp.ge.s32.totalorder %s9, 14
    %s16 = sphi 0, %s28
    %s17 = sphi 0, %s24
    %s18 = sphi 0, %s16
    %s19 = sphi 0, %s17
    %s20 = sphi 0, %s18
    %s21 = sphi 0, %s19
    %s33 = sphi 0, %s35
    %s36 = sphi 0, %s33
    %s37 = sphi 0, %s36
    %s53 = sphi 0, %s37
    %s59 = sphi 0, %s61
    %s62 = sphi 0, %s59
    %s63 = sphi 0, %s62
    %s79 = sphi 0, %s63
    %s83 = sphi 0, %s83
    %s85 = sphi 0, %s83
    %s86 = sphi 0, %s85
    %s100 = sphi 0, %s86
    %s108 = sphi 0, %s110
    %s111 = sphi 0, %s108
    %s112 = sphi 0, %s111
    %s128 = sphi 0, %s112
  $region4: #{forward.3} parent=0 // loop_header_branch
    %12 = sbr.rel (%p10) target = $region8
  $region5: #{forward.3} parent=0 // loop_body
    %s14 = ssub.s32 %s9, 1
    %s15 = ssub.s32 %s9, 2
    %s22 = sadd.s32 1, %s17
    %p23 = scmp.ge.s32.totalorder %s22, 2
    %s24 = scalar_select %p23, 0, %s22
    %s25 = sadd.s32 1, %s16
    %s26 = scalar_select %p23, %s25, %s16
    %p27 = scmp.ge.s32.totalorder %s26, 6
    %s28 = scalar_select %p27, 0, %s26
    %s29 = ssub.s32 %s16, %s28
    %s30 = ssub.s32 %s17, %s24
    %s31 = sor.u32 %s29, %s30
    %p32 = scmp.eq.s32.totalorder %s31, 0
    %s34 = sadd.s32 %s33, 1
    %s35 = scalar_select %p32, %s33, %s34
    %p38 = pneg %p32
    %p39 = scmp.eq.s32.totalorder %s9, 11
    %p40 = por %p38, %p39
    %p41 = scmp.ne.s32.totalorder %s33, %s36
    %p42 = scmp.eq.s32.totalorder %s9, 0
    %p43 = por %p41, %p42
    %p44 = scmp.ne.s32.totalorder %s33, %s36
    %p45 = scmp.eq.s32.totalorder %s14, 11
    %p46 = por %p44, %p45
    %p47 = scmp.ne.s32.totalorder %s36, %s37
    %p48 = scmp.eq.s32.totalorder %s14, 0
    %p49 = por %p47, %p48
    %p50 = scmp.ne.s32.totalorder %s36, %s37
    %p51 = scmp.eq.s32.totalorder %s15, 11
    %p52 = por %p50, %p51
    %p54 = scmp.ne.s32.totalorder %s37, %s53
    %p55 = scmp.eq.s32.totalorder %s15, 0
    %p56 = por %p54, %p55
    %s57 = ssub.s32 %s16, %s28
    %p58 = scmp.eq.s32.totalorder %s57, 0
    %s60 = sadd.s32 %s59, 1
    %s61 = scalar_select %p58, %s59, %s60
    %p64 = pneg %p58
    %p65 = scmp.eq.s32.totalorder %s9, 11
    %p66 = por %p64, %p65
    %p67 = scmp.ne.s32.totalorder %s59, %s62
    %p68 = scmp.eq.s32.totalorder %s9, 0
    %p69 = por %p67, %p68
    %p70 = scmp.ne.s32.totalorder %s59, %s62
    %p71 = scmp.eq.s32.totalorder %s14, 11
    %p72 = por %p70, %p71
    %p73 = scmp.ne.s32.totalorder %s62, %s63
    %p74 = scmp.eq.s32.totalorder %s14, 0
    %p75 = por %p73, %p74
    %p76 = scmp.ne.s32.totalorder %s62, %s63
    %p77 = scmp.eq.s32.totalorder %s15, 11
    %p78 = por %p76, %p77
    %p80 = scmp.ne.s32.totalorder %s63, %s79
    %p81 = scmp.eq.s32.totalorder %s15, 0
    %p82 = por %p80, %p81
    %s84 = sadd.s32 %s83, 1
    %p87 = scmp.eq.s32.totalorder %s9, 11
    %p88 = scmp.ne.s32.totalorder %s83, %s85
    %p89 = scmp.eq.s32.totalorder %s9, 0
    %p90 = por %p88, %p89
    %p91 = scmp.ne.s32.totalorder %s83, %s85
    %p92 = scmp.eq.s32.totalorder %s14, 11
    %p93 = por %p91, %p92
    %p94 = scmp.ne.s32.totalorder %s85, %s86
    %p95 = scmp.eq.s32.totalorder %s14, 0
    %p96 = por %p94, %p95
    %p97 = scmp.ne.s32.totalorder %s85, %s86
    %p98 = scmp.eq.s32.totalorder %s15, 11
    %p99 = por %p97, %p98
    %p101 = scmp.ne.s32.totalorder %s86, %s100
    %p102 = scmp.eq.s32.totalorder %s15, 0
    %p103 = por %p101, %p102
    %s104 = ssub.s32 %s16, %s28
    %s105 = ssub.s32 %s17, %s24
    %s106 = sor.u32 %s104, %s105
    %p107 = scmp.eq.s32.totalorder %s106, 0
    %s109 = sadd.s32 %s108, 1
    %s110 = scalar_select %p107, %s108, %s109
    %p113 = pneg %p107
    %p114 = scmp.eq.s32.totalorder %s9, 11
    %p115 = por %p113, %p114
    %p116 = scmp.ne.s32.totalorder %s108, %s111
    %p117 = scmp.eq.s32.totalorder %s9, 0
    %p118 = por %p116, %p117
    %p119 = scmp.ne.s32.totalorder %s108, %s111
    %p120 = scmp.eq.s32.totalorder %s14, 11
    %p121 = por %p119, %p120
    %p122 = scmp.ne.s32.totalorder %s111, %s112
    %p123 = scmp.eq.s32.totalorder %s14, 0
    %p124 = por %p122, %p123
    %p125 = scmp.ne.s32.totalorder %s111, %s112
    %p126 = scmp.eq.s32.totalorder %s15, 11
    %p127 = por %p125, %p126
    %p129 = scmp.ne.s32.totalorder %s112, %s128
    %p130 = scmp.eq.s32.totalorder %s15, 0
    %p131 = por %p129, %p130
    %p132 = scmp.le.s32.totalorder 1, %s9
    %p133 = scmp.lt.s32.totalorder %s9, 13
    %p134 = pnand %p132, %p133
    %p135 = pneg %p134
    // Predicated region
    $region9: #{forward.3} parent=5 // pred_check
      _
    $region10: #{forward.3} parent=5 // pred_check_branch
      %137 = sbr.rel (%p134) target = $region12
    $region11: #{forward.3} parent=5 // pred_region
      %s138 = ssub.s32 %s9, 1
      // Predicated region
      $region13: #{forward.3} parent=11 // pred_check
        %p139 = pneg %p96
      $region14: #{forward.3} parent=11 // pred_check_branch
        %141 = sbr.rel (%p139) target = $region16
      $region15: #{forward.3} parent=11 // pred_region
        _
      $region16: #{forward.3} parent=11 // pred_fallthru
        _
    $region12: #{forward.3} parent=5 // pred_fallthru
      _
    %p142 = scmp.lt.s32.totalorder %s9, 12
    // Predicated region
    $region17: #{forward.3} parent=5 // pred_check
      %p143 = pneg %p142
    $region18: #{forward.3} parent=5 // pred_check_branch
      %145 = sbr.rel (%p143) target = $region20
    $region19: #{forward.3} parent=5 // pred_region
      // Predicated region
      $region21: #{forward.3} parent=19 // pred_check
        %p146 = pneg %p43
      $region22: #{forward.3} parent=19 // pred_check_branch
        %148 = sbr.rel (%p146) target = $region24
      $region23: #{forward.3} parent=19 // pred_region
        %p149 = scmp.lt.s32.totalorder %s16, 5
        %s150 = scalar_select %p149, %s16, 5
        %p151 = scmp.lt.s32.totalorder %s17, 1
        %s152 = scalar_select %p151, %s17, 1
        %s153 = smul.addr %s150, 2
        %s154 = sadd.s32 %s152, %s153
        %s155 = smul.addr %s154, 4
        %s156 = scalar_lea.vmem %s0, %s155
      $region24: #{forward.3} parent=19 // pred_fallthru
        _
      // Predicated region
      $region25: #{forward.3} parent=19 // pred_check
        %p157 = pneg %p69
      $region26: #{forward.3} parent=19 // pred_check_branch
        %159 = sbr.rel (%p157) target = $region28
      $region27: #{forward.3} parent=19 // pred_region
        %p160 = scmp.lt.s32.totalorder %s16, 5
        %s161 = scalar_select %p160, %s16, 5
        %s162 = smul.addr %s161, 2
        %s163 = smul.addr %s162, 4
        %s164 = scalar_lea.vmem %s1, %s163
      $region28: #{forward.3} parent=19 // pred_fallthru
        _
    $region20: #{forward.3} parent=5 // pred_fallthru
      _
    %p165 = scmp.le.s32.totalorder 1, %s9
    %p166 = scmp.lt.s32.totalorder %s9, 13
    %p167 = pnand %p165, %p166
    %p168 = pneg %p167
    // Predicated region
    $region29: #{forward.3} parent=5 // pred_check
      _
    $region30: #{forward.3} parent=5 // pred_check_branch
      %170 = sbr.rel (%p167) target = $region32
    $region31: #{forward.3} parent=5 // pred_region
      %s171 = ssub.s32 %s9, 1
      %p172 = scmp.lt.s32.totalorder %s18, 5
      %s173 = scalar_select %p172, %s18, 5
      %p174 = scmp.lt.s32.totalorder %s19, 1
      %s175 = scalar_select %p174, %s19, 1
      %s176 = smul.addr %s173, 2
      %s177 = sadd.s32 %s175, %s176
      %s178 = smul.addr %s177, 4
      %s179 = scalar_lea.vmem %s0, %s178
      %p180 = pneg %p49
      %p181 = pneg %p46
      %p182 = scmp.lt.s32.totalorder %s18, 5
      %s183 = scalar_select %p182, %s18, 5
      %s184 = smul.addr %s183, 2
      %s185 = smul.addr %s184, 4
      %s186 = scalar_lea.vmem %s1, %s185
      %p187 = pneg %p75
      %p188 = pneg %p72
      %p189 = pneg %p96
      %p190 = pneg %p93
      %p191 = pneg %p124
      %p192 = pneg %p121
      %p193 = scmp.lt.s32.totalorder %s18, 5
      %s194 = scalar_select %p193, %s18, 5
      %p195 = scmp.lt.s32.totalorder %s19, 1
      %s196 = scalar_select %p195, %s19, 1
      %s197 = smul.addr %s196, 2
      %s198 = smul.addr %s194, 4
      %s199 = sadd.s32 %s197, %s198
      %s200 = smul.addr %s199, 8
      %s201 = scalar_lea.vmem %s3, %s200
      %p202 = scmp.lt.s32.totalorder %s18, 5
      %s203 = scalar_select %p202, %s18, 5
      %p204 = scmp.lt.s32.totalorder %s19, 1
      %s205 = scalar_select %p204, %s19, 1
      %s206 = smul.addr %s203, 2
      %s207 = sadd.s32 %s205, %s206
      %s208 = smul.addr %s207, 4
      %s209 = scalar_lea.vmem %s0, %s208
      %p210 = scmp.lt.s32.totalorder %s18, 5
      %s211 = scalar_select %p210, %s18, 5
      %s212 = smul.addr %s211, 2
      %s213 = smul.addr %s212, 4
      %s214 = scalar_lea.vmem %s1, %s213
      %p215 = scmp.lt.s32.totalorder %s18, 5
      %s216 = scalar_select %p215, %s18, 5
      %p217 = scmp.lt.s32.totalorder %s19, 1
      %s218 = scalar_select %p217, %s19, 1
      %s219 = smul.addr %s218, 2
      %s220 = smul.addr %s216, 4
      %s221 = sadd.s32 %s219, %s220
      %s222 = smul.addr %s221, 8
      %s223 = scalar_lea.vmem %s3, %s222
      %v225 = vld [vmem:[%s209] sm:$0xf]
      %v226 = vld [vmem:[%s214] sm:$0xf]
      %v227 = vld [vmem:[%s214 + $0x4] sm:$0x3]
      %v230 = vunpack.c.l.b16 %v226
      %v231 = vunpack.c.l.b16 %v227
      %v232 = vpack.c.b16 %v231, %v230
      %vm233 = vcmask 64512
      %v235 = vsel %vm233, %v232, 0
      %vm237 = vcmask 1043456
      %v239 = vsel %vm237, %v225, 0
      %241 = vmatprep.subr.bf16.mxu0 0
      %242 = vmatpush1.bf16.msra.mxu0 %v239
      %243 = vmatprep.subr.bf16.mxu0 0
      %244 = vmatpush1.bf16.msra.mxu0 0
      %245 = vmatprep.subr.bf16.mxu0 0
      %246 = vmatpush1.bf16.msra.mxu0 0
      %247 = vmatprep.subr.bf16.mxu0 0
      %248 = vmatpush1.bf16.msra.mxu0 0
      %249 = vmatprep.subr.bf16.mxu0 0
      %250 = vmatpush1.bf16.msra.mxu0 0
      %251 = vmatprep.subr.bf16.mxu0 0
      %252 = vmatpush1.bf16.msra.mxu0 0
      %253 = vmatprep.subr.bf16.mxu0 0
      %254 = vmatpush1.bf16.msra.mxu0 0
      %255 = vmatprep.subr.bf16.mxu0 0
      %256 = vmatpush1.bf16.msra.mxu0 0
      %257 = vmatprep.subr.bf16.mxu0 0
      %258 = vmatpush1.bf16.msra.mxu0 0
      %259 = vmatprep.subr.bf16.mxu0 0
      %260 = vmatpush1.bf16.msra.mxu0 0
      %261 = vmatprep.subr.bf16.mxu0 0
      %262 = vmatpush1.bf16.msra.mxu0 0
      %263 = vmatprep.subr.bf16.mxu0 0
      %264 = vmatpush1.bf16.msra.mxu0 0
      %265 = vmatprep.subr.bf16.mxu0 0
      %266 = vmatpush1.bf16.msra.mxu0 0
      %267 = vmatprep.subr.bf16.mxu0 0
      %268 = vmatpush1.bf16.msra.mxu0 0
      %269 = vmatprep.subr.bf16.mxu0 0
      %270 = vmatpush1.bf16.msra.mxu0 0
      %271 = vmatprep.subr.bf16.mxu0 0
      %272 = vmatpush1.bf16.msra.mxu0 0
      %273 = vmatprep.mubr.bf16.mxu0 0
      %274 = vmatmul.mubr.bf16.gmra.mrb[0].mxu0 %v235
      %v275 = vpop.f32.mrb[0].mxu0
      %v276 = vadd.f32 0.0, %v275
      %v277 = vpop.f32.mrb[0].mxu0
      %v278 = vpop.f32.mrb[0].mxu0
      %v279 = vadd.f32 0.0, %v278
      %v280 = vpop.f32.mrb[0].mxu0
      %281 = vdwg.mxu0
      %vm282 = vcmask 523264
      %283 = vst.msk [vmem:[%s223] sm:$0xff] %vm282, %v276
      %vm284 = vcmask 519168
      %285 = vst.msk [vmem:[%s223 + $0x8] sm:$0xf] %vm284, %v279
      %p286 = scmp.lt.s32.totalorder %s18, 5
      %s287 = scalar_select %p286, %s18, 5
      %p288 = scmp.lt.s32.totalorder %s19, 1
      %s289 = scalar_select %p288, %s19, 1
      %s290 = smul.addr %s289, 2
      %s291 = smul.addr %s287, 4
      %s292 = sadd.s32 %s290, %s291
      %s293 = smul.addr %s292, 8
      %s294 = scalar_lea.vmem %s3, %s293
      // Predicated region
      $region33: #{forward.3} parent=31 // pred_check
        %p295 = pneg %p121
      $region34: #{forward.3} parent=31 // pred_check_branch
        %297 = sbr.rel (%p295) target = $region36
      $region35: #{forward.3} parent=31 // pred_region
        _
      $region36: #{forward.3} parent=31 // pred_fallthru
        _
    $region32: #{forward.3} parent=5 // pred_fallthru
      _
    %p298 = scmp.le.s32.totalorder 2, %s9
    // Predicated region
    $region37: #{forward.3} parent=5 // pred_check
      %p299 = pneg %p298
    $region38: #{forward.3} parent=5 // pred_check_branch
      %301 = sbr.rel (%p299) target = $region40
    $region39: #{forward.3} parent=5 // pred_region
      %s302 = ssub.s32 %s9, 2
      // Predicated region
      $region41: #{forward.3} parent=39 // pred_check
        %p303 = pneg %p127
      $region42: #{forward.3} parent=39 // pred_check_branch
        %305 = sbr.rel (%p303) target = $region44
      $region43: #{forward.3} parent=39 // pred_region
        %p306 = scmp.lt.s32.totalorder %s20, 5
        %s307 = scalar_select %p306, %s20, 5
        %p308 = scmp.lt.s32.totalorder %s21, 1
        %s309 = scalar_select %p308, %s21, 1
        %s310 = smul.addr %s309, 2
        %s311 = smul.addr %s307, 4
        %s312 = sadd.s32 %s310, %s311
        %s313 = smul.addr %s312, 8
        %s314 = scalar_lea.vmem %s3, %s313
      $region44: #{forward.3} parent=39 // pred_fallthru
        _
    $region40: #{forward.3} parent=5 // pred_fallthru
      _
  $region6: #{forward.3} parent=0 // loop_footer
    %s13 = sadd.s32 1, %s9
  $region7: #{forward.3} parent=0 // loop_footer_branch
    %8 = sbr.rel target = $region3
  $region8: #{forward.3} parent=0 // loop_exit
    _

// kernel: forward.2
$region0: #{forward.2}
  #allocation0 [shape = 'u32[]', space=smem, size = 0x4, offset = 0x4, fixed_abs, tag = 'smem constant byte address 0x4 - core index']
  #allocation1 [shape = 'u32[144,128]{1,0:T(1,128)}', space=vmem, size = 0x12000, scoped, tag = 'internal scratch']
  %s0 = inlined_call_operand.vmem [shape: bf16[1,2,8,290], index: 0, kind: input, shape index: {}]
  %s1 = inlined_call_operand.vmem [shape: bf16[1,9,6,8], index: 1, kind: input, shape index: {}]
  %s2 = inlined_call_operand.vmem [shape: f32[3,1,256], index: 2, kind: input, shape index: {}]
  %s3 = inlined_call_operand.vmem [shape: f32[1,2,6,256], index: 3, kind: output, shape index: {}]
  %s4 = sld [smem:[#allocation0]]
  $region45: #{forward.2} parent=0
    _
  %s6 = ssub.s32 1, %s4
  %s7 = scalar_select 0, %s6, %s4
  loop: start=0, step=1, limit=4
  $region2: #{forward.2} parent=0 // loop_pre_header
    _
  $region3: #{forward.2} parent=0 // loop_header
    %s9 = sphi 0, %s13
    %p10 = scmp.ge.s32.totalorder %s9, 4
    %s16 = sphi 0, %s28
    %s17 = sphi 0, %s24
    %s18 = sphi 0, %s16
    %s19 = sphi 0, %s17
    %s20 = sphi 0, %s18
    %s21 = sphi 0, %s19
    %s33 = sphi 0, %s35
    %s36 = sphi 0, %s33
    %s37 = sphi 0, %s36
    %s53 = sphi 0, %s37
    %s59 = sphi 0, %s61
    %s62 = sphi 0, %s59
    %s63 = sphi 0, %s62
    %s79 = sphi 0, %s63
    %s83 = sphi 0, %s83
    %s85 = sphi 0, %s83
    %s86 = sphi 0, %s85
    %s100 = sphi 0, %s86
    %s108 = sphi 0, %s110
    %s111 = sphi 0, %s108
    %s112 = sphi 0, %s111
    %s128 = sphi 0, %s112
  $region4: #{forward.2} parent=0 // loop_header_branch
    %12 = sbr.rel (%p10) target = $region8
  $region5: #{forward.2} parent=0 // loop_body
    %s14 = ssub.s32 %s9, 1
    %s15 = ssub.s32 %s9, 2
    %s22 = sadd.s32 1, %s17
    %p23 = scmp.ge.s32.totalorder %s22, 2
    %s24 = scalar_select %p23, 0, %s22
    %s25 = sadd.s32 1, %s16
    %s26 = scalar_select %p23, %s25, %s16
    %p27 = scmp.ge.s32.totalorder %s26, 1
    %s28 = scalar_select %p27, 0, %s26
    %s29 = ssub.s32 %s16, %s28
    %s30 = ssub.s32 %s17, %s24
    %s31 = sor.u32 %s29, %s30
    %p32 = scmp.eq.s32.totalorder %s31, 0
    %s34 = sadd.s32 %s33, 1
    %s35 = scalar_select %p32, %s33, %s34
    %p38 = pneg %p32
    %p39 = scmp.eq.s32.totalorder %s9, 1
    %p40 = por %p38, %p39
    %p41 = scmp.ne.s32.totalorder %s33, %s36
    %p42 = scmp.eq.s32.totalorder %s9, 0
    %p43 = por %p41, %p42
    %p44 = scmp.ne.s32.totalorder %s33, %s36
    %p45 = scmp.eq.s32.totalorder %s14, 1
    %p46 = por %p44, %p45
    %p47 = scmp.ne.s32.totalorder %s36, %s37
    %p48 = scmp.eq.s32.totalorder %s14, 0
    %p49 = por %p47, %p48
    %p50 = scmp.ne.s32.totalorder %s36, %s37
    %p51 = scmp.eq.s32.totalorder %s15, 1
    %p52 = por %p50, %p51
    %p54 = scmp.ne.s32.totalorder %s37, %s53
    %p55 = scmp.eq.s32.totalorder %s15, 0
    %p56 = por %p54, %p55
    %s57 = ssub.s32 %s16, %s28
    %p58 = scmp.eq.s32.totalorder %s57, 0
    %s60 = sadd.s32 %s59, 1
    %s61 = scalar_select %p58, %s59, %s60
    %p64 = pneg %p58
    %p65 = scmp.eq.s32.totalorder %s9, 1
    %p66 = por %p64, %p65
    %p67 = scmp.ne.s32.totalorder %s59, %s62
    %p68 = scmp.eq.s32.totalorder %s9, 0
    %p69 = por %p67, %p68
    %p70 = scmp.ne.s32.totalorder %s59, %s62
    %p71 = scmp.eq.s32.totalorder %s14, 1
    %p72 = por %p70, %p71
    %p73 = scmp.ne.s32.totalorder %s62, %s63
    %p74 = scmp.eq.s32.totalorder %s14, 0
    %p75 = por %p73, %p74
    %p76 = scmp.ne.s32.totalorder %s62, %s63
    %p77 = scmp.eq.s32.totalorder %s15, 1
    %p78 = por %p76, %p77
    %p80 = scmp.ne.s32.totalorder %s63, %s79
    %p81 = scmp.eq.s32.totalorder %s15, 0
    %p82 = por %p80, %p81
    %s84 = sadd.s32 %s83, 1
    %p87 = scmp.eq.s32.totalorder %s9, 1
    %p88 = scmp.ne.s32.totalorder %s83, %s85
    %p89 = scmp.eq.s32.totalorder %s9, 0
    %p90 = por %p88, %p89
    %p91 = scmp.ne.s32.totalorder %s83, %s85
    %p92 = scmp.eq.s32.totalorder %s14, 1
    %p93 = por %p91, %p92
    %p94 = scmp.ne.s32.totalorder %s85, %s86
    %p95 = scmp.eq.s32.totalorder %s14, 0
    %p96 = por %p94, %p95
    %p97 = scmp.ne.s32.totalorder %s85, %s86
    %p98 = scmp.eq.s32.totalorder %s15, 1
    %p99 = por %p97, %p98
    %p101 = scmp.ne.s32.totalorder %s86, %s100
    %p102 = scmp.eq.s32.totalorder %s15, 0
    %p103 = por %p101, %p102
    %s104 = ssub.s32 %s16, %s28
    %s105 = ssub.s32 %s17, %s24
    %s106 = sor.u32 %s104, %s105
    %p107 = scmp.eq.s32.totalorder %s106, 0
    %s109 = sadd.s32 %s108, 1
    %s110 = scalar_select %p107, %s108, %s109
    %p113 = pneg %p107
    %p114 = scmp.eq.s32.totalorder %s9, 1
    %p115 = por %p113, %p114
    %p116 = scmp.ne.s32.totalorder %s108, %s111
    %p117 = scmp.eq.s32.totalorder %s9, 0
    %p118 = por %p116, %p117
    %p119 = scmp.ne.s32.totalorder %s108, %s111
    %p120 = scmp.eq.s32.totalorder %s14, 1
    %p121 = por %p119, %p120
    %p122 = scmp.ne.s32.totalorder %s111, %s112
    %p123 = scmp.eq.s32.totalorder %s14, 0
    %p124 = por %p122, %p123
    %p125 = scmp.ne.s32.totalorder %s111, %s112
    %p126 = scmp.eq.s32.totalorder %s15, 1
    %p127 = por %p125, %p126
    %p129 = scmp.ne.s32.totalorder %s112, %s128
    %p130 = scmp.eq.s32.totalorder %s15, 0
    %p131 = por %p129, %p130
    %p132 = scmp.le.s32.totalorder 1, %s9
    %p133 = scmp.lt.s32.totalorder %s9, 3
    %p134 = pnand %p132, %p133
    %p135 = pneg %p134
    // Predicated region
    $region9: #{forward.2} parent=5 // pred_check
      _
    $region10: #{forward.2} parent=5 // pred_check_branch
      %137 = sbr.rel (%p134) target = $region12
    $region11: #{forward.2} parent=5 // pred_region
      %s138 = ssub.s32 %s9, 1
      // Predicated region
      $region13: #{forward.2} parent=11 // pred_check
        %p139 = pneg %p75
      $region14: #{forward.2} parent=11 // pred_check_branch
        %141 = sbr.rel (%p139) target = $region16
      $region15: #{forward.2} parent=11 // pred_region
        %p142 = scmp.lt.s32.totalorder %s18, 0
        %s143 = scalar_select %p142, %s18, 0
        %s144 = smul.addr %s143, 9
        %s145 = smul.addr %s144, 4
        %s146 = scalar_lea.vmem %s1, %s145
      $region16: #{forward.2} parent=11 // pred_fallthru
        _
      // Predicated region
      $region17: #{forward.2} parent=11 // pred_check
        %p147 = pneg %p96
      $region18: #{forward.2} parent=11 // pred_check_branch
        %149 = sbr.rel (%p147) target = $region20
      $region19: #{forward.2} parent=11 // pred_region
        _
      $region20: #{forward.2} parent=11 // pred_fallthru
        _
    $region12: #{forward.2} parent=5 // pred_fallthru
      _
    %p150 = scmp.lt.s32.totalorder %s9, 2
    // Predicated region
    $region21: #{forward.2} parent=5 // pred_check
      %p151 = pneg %p150
    $region22: #{forward.2} parent=5 // pred_check_branch
      %153 = sbr.rel (%p151) target = $region24
    $region23: #{forward.2} parent=5 // pred_region
      // Predicated region
      $region25: #{forward.2} parent=23 // pred_check
        %p154 = pneg %p43
      $region26: #{forward.2} parent=23 // pred_check_branch
        %156 = sbr.rel (%p154) target = $region28
      $region27: #{forward.2} parent=23 // pred_region
        %p157 = scmp.lt.s32.totalorder %s16, 0
        %s158 = scalar_select %p157, %s16, 0
        %p159 = scmp.lt.s32.totalorder %s17, 1
        %s160 = scalar_select %p159, %s17, 1
        %s161 = smul.addr %s160, 3
        %s162 = smul.addr %s158, 6
        %s163 = sadd.s32 %s161, %s162
        %s164 = smul.addr %s163, 4
        %s165 = scalar_lea.vmem %s0, %s164
      $region28: #{forward.2} parent=23 // pred_fallthru
        _
    $region24: #{forward.2} parent=5 // pred_fallthru
      _
    %p166 = scmp.le.s32.totalorder 1, %s9
    %p167 = scmp.lt.s32.totalorder %s9, 3
    %p168 = pnand %p166, %p167
    %p169 = pneg %p168
    // Predicated region
    $region29: #{forward.2} parent=5 // pred_check
      _
    $region30: #{forward.2} parent=5 // pred_check_branch
      %171 = sbr.rel (%p168) target = $region32
    $region31: #{forward.2} parent=5 // pred_region
      %s172 = ssub.s32 %s9, 1
      %p173 = scmp.lt.s32.totalorder %s18, 0
      %s174 = scalar_select %p173, %s18, 0
      %p175 = scmp.lt.s32.totalorder %s19, 1
      %s176 = scalar_select %p175, %s19, 1
      %s177 = smul.addr %s176, 3
      %s178 = smul.addr %s174, 6
      %s179 = sadd.s32 %s177, %s178
      %s180 = smul.addr %s179, 4
      %s181 = scalar_lea.vmem %s0, %s180
      %p182 = pneg %p49
      %p183 = pneg %p46
      %p184 = scmp.lt.s32.totalorder %s18, 0
      %s185 = scalar_select %p184, %s18, 0
      %s186 = smul.addr %s185, 9
      %s187 = smul.addr %s186, 4
      %s188 = scalar_lea.vmem %s1, %s187
      %p189 = pneg %p75
      %p190 = pneg %p72
      %p191 = pneg %p96
      %p192 = pneg %p93
      %p193 = pneg %p124
      %p194 = pneg %p121
      %p195 = scmp.lt.s32.totalorder %s18, 0
      %s196 = scalar_select %p195, %s18, 0
      %p197 = scmp.lt.s32.totalorder %s19, 1
      %s198 = scalar_select %p197, %s19, 1
      %s199 = smul.addr %s198, 2
      %s200 = smul.addr %s196, 4
      %s201 = sadd.s32 %s199, %s200
      %s202 = smul.addr %s201, 8
      %s203 = scalar_lea.vmem %s3, %s202
      %p204 = scmp.lt.s32.totalorder %s18, 0
      %s205 = scalar_select %p204, %s18, 0
      %p206 = scmp.lt.s32.totalorder %s19, 1
      %s207 = scalar_select %p206, %s19, 1
      %s208 = smul.addr %s207, 3
      %s209 = smul.addr %s205, 6
      %s210 = sadd.s32 %s208, %s209
      %s211 = smul.addr %s210, 4
      %s212 = scalar_lea.vmem %s0, %s211
      %p213 = scmp.lt.s32.totalorder %s18, 0
      %s214 = scalar_select %p213, %s18, 0
      %s215 = smul.addr %s214, 9
      %s216 = smul.addr %s215, 4
      %s217 = scalar_lea.vmem %s1, %s216
      %p218 = scmp.lt.s32.totalorder %s18, 0
      %s219 = scalar_select %p218, %s18, 0
      %p220 = scmp.lt.s32.totalorder %s19, 1
      %s221 = scalar_select %p220, %s19, 1
      %s222 = smul.addr %s221, 2
      %s223 = smul.addr %s219, 4
      %s224 = sadd.s32 %s222, %s223
      %s225 = smul.addr %s224, 8
      %s226 = scalar_lea.vmem %s3, %s225
      %v228 = vld [vmem:[%s212] sm:$0xff]
      %v229 = vld [vmem:[%s217] sm:$0x7]
      %v231 = vunpack.c.l.b16 %v228
      %v232 = vunpack.c.h.b16 %v228
      %v233 = vpack.c.b16 %v231, %v231
      %v234 = vpack.c.b16 %v232, %v232
      %vm235 = vcmask 64512
      %v237 = vsel %vm235, %v229, 0
      %vm239 = vcmask 1043456
      %v241 = vsel %vm239, %v233, 0
      %v244 = vsel %vm239, %v234, 0
      %246 = vmatprep.subr.bf16.mxu0 %v244
      %247 = vmatpush1.bf16.msra.mxu0 %v241
      %248 = vmatprep.subr.bf16.mxu0 0
      %249 = vmatpush1.bf16.msra.mxu0 0
      %250 = vmatprep.subr.bf16.mxu0 0
      %251 = vmatpush1.bf16.msra.mxu0 0
      %252 = vmatprep.subr.bf16.mxu0 0
      %253 = vmatpush1.bf16.msra.mxu0 0
      %254 = vmatprep.subr.bf16.mxu0 0
      %255 = vmatpush1.bf16.msra.mxu0 0
      %256 = vmatprep.subr.bf16.mxu0 0
      %257 = vmatpush1.bf16.msra.mxu0 0
      %258 = vmatprep.subr.bf16.mxu0 0
      %259 = vmatpush1.bf16.msra.mxu0 0
      %260 = vmatprep.subr.bf16.mxu0 0
      %261 = vmatpush1.bf16.msra.mxu0 0
      %262 = vmatprep.subr.bf16.mxu0 0
      %263 = vmatpush1.bf16.msra.mxu0 0
      %264 = vmatprep.subr.bf16.mxu0 0
      %265 = vmatpush1.bf16.msra.mxu0 0
      %266 = vmatprep.subr.bf16.mxu0 0
      %267 = vmatpush1.bf16.msra.mxu0 0
      %268 = vmatprep.subr.bf16.mxu0 0
      %269 = vmatpush1.bf16.msra.mxu0 0
      %270 = vmatprep.subr.bf16.mxu0 0
      %271 = vmatpush1.bf16.msra.mxu0 0
      %272 = vmatprep.subr.bf16.mxu0 0
      %273 = vmatpush1.bf16.msra.mxu0 0
      %274 = vmatprep.subr.bf16.mxu0 0
      %275 = vmatpush1.bf16.msra.mxu0 0
      %276 = vmatprep.subr.bf16.mxu0 0
      %277 = vmatpush1.bf16.msra.mxu0 0
      %278 = vmatprep.mubr.bf16.mxu0 0
      %279 = vmatmul.mubr.bf16.gmra.mrb[0].mxu0 %v237
      %v280 = vpop.f32.mrb[0].mxu0
      %v281 = vadd.f32 0.0, %v280
      %v282 = vpop.f32.mrb[0].mxu0
      %v283 = vadd.f32 0.0, %v282
      %v284 = vpop.f32.mrb[0].mxu0
      %v285 = vpop.f32.mrb[0].mxu0
      %286 = vdwg.mxu0
      %v287 = vld [vmem:[%s2] sm:$0x3]
      %v289 = vlaneseq
      %v290 = vshrl.u32 %v289, 7
      %v291 = vsub.s32 0, %v290
      %v292 = vrot.slane %v287, %v291
      %v293 = vlaneseq
      %v294 = vshrl.u32 %v293, 7
      %v295 = vsub.s32 1, %v294
      %v296 = vrot.slane %v287, %v295
      %v299 = vmul.f32 %v281, %v292
      %v300 = vmul.f32 %v283, %v296
      %301 = vst [vmem:[%s226] sm:$0x3f] %v299
      %302 = vst [vmem:[%s226 + $0x8] sm:$0x3f] %v300
      %v303 = vld [vmem:[%s212] sm:$0xff]
      %v304 = vld [vmem:[%s212 + $0x8] sm:$0xf]
      %s305 = scalar_lea.vmem %s217, 4
      %v306 = vld [vmem:[%s305] sm:$0x7]
      %v309 = vunpack.c.l.b16 %v303
      %v310 = vunpack.c.h.b16 %v303
      %v311 = vunpack.c.l.b16 %v304
      %v312 = vpack.c.b16 %v309, %v309
      %v313 = vpack.c.b16 %v310, %v310
      %v314 = vpack.c.b16 %v311, %v311
      %315 = vrot.lane.b32.xlu0 %v312, 127
      %v316 = vpop.permute.xlu0 %315
      %317 = vrot.lane.b32.xlu0 %v313, 127
      %v318 = vpop.permute.xlu0 %317
      %319 = vrot.lane.b32.xlu0 %v314, 127
      %v320 = vpop.permute.xlu0 %319
      %vm321 = vcmask 1039360
      %v322 = vsel %vm321, %v316, %v318
      %v323 = vsel %vm321, %v318, %v320
      %v325 = vsel %vm235, %v306, 0
      %v328 = vsel %vm239, %v322, 0
      %v331 = vsel %vm239, %v323, 0
      %333 = vmatprep.subr.bf16.mxu0 %v331
      %334 = vmatpush1.bf16.msra.mxu0 %v328
      %335 = vmatprep.subr.bf16.mxu0 0
      %336 = vmatpush1.bf16.msra.mxu0 0
      %337 = vmatprep.subr.bf16.mxu0 0
      %338 = vmatpush1.bf16.msra.mxu0 0
      %339 = vmatprep.subr.bf16.mxu0 0
      %340 = vmatpush1.bf16.msra.mxu0 0
      %341 = vmatprep.subr.bf16.mxu0 0
      %342 = vmatpush1.bf16.msra.mxu0 0
      %343 = vmatprep.subr.bf16.mxu0 0
      %344 = vmatpush1.bf16.msra.mxu0 0
      %345 = vmatprep.subr.bf16.mxu0 0
      %346 = vmatpush1.bf16.msra.mxu0 0
      %347 = vmatprep.subr.bf16.mxu0 0
      %348 = vmatpush1.bf16.msra.mxu0 0
      %349 = vmatprep.subr.bf16.mxu0 0
      %350 = vmatpush1.bf16.msra.mxu0 0
      %351 = vmatprep.subr.bf16.mxu0 0
      %352 = vmatpush1.bf16.msra.mxu0 0
      %353 = vmatprep.subr.bf16.mxu0 0
      %354 = vmatpush1.bf16.msra.mxu0 0
      %355 = vmatprep.subr.bf16.mxu0 0
      %356 = vmatpush1.bf16.msra.mxu0 0
      %357 = vmatprep.subr.bf16.mxu0 0
      %358 = vmatpush1.bf16.msra.mxu0 0
      %359 = vmatprep.subr.bf16.mxu0 0
      %360 = vmatpush1.bf16.msra.mxu0 0
      %361 = vmatprep.subr.bf16.mxu0 0
      %362 = vmatpush1.bf16.msra.mxu0 0
      %363 = vmatprep.subr.bf16.mxu0 0
      %364 = vmatpush1.bf16.msra.mxu0 0
      %365 = vmatprep.mubr.bf16.mxu0 0
      %366 = vmatmul.mubr.bf16.gmra.mrb[0].mxu0 %v325
      %v367 = vpop.f32.mrb[0].mxu0
      %v368 = vadd.f32 0.0, %v367
      %v369 = vpop.f32.mrb[0].mxu0
      %v370 = vadd.f32 0.0, %v369
      %v371 = vpop.f32.mrb[0].mxu0
      %v372 = vpop.f32.mrb[0].mxu0
      %373 = vdwg.mxu0
      %v374 = vld [vmem:[%s226] sm:$0x3f]
      %v375 = vld [vmem:[%s226 + $0x8] sm:$0x3f]
      %v376 = vadd.f32 %v374, %v368
      %v377 = vadd.f32 %v375, %v370
      %378 = vst [vmem:[%s226] sm:$0x3f] %v376
      %379 = vst [vmem:[%s226 + $0x8] sm:$0x3f] %v377
      %v380 = vld [vmem:[%s212] sm:$0xff]
      %v381 = vld [vmem:[%s212 + $0x8] sm:$0xf]
      %s382 = scalar_lea.vmem %s217, 8
      %v383 = vld [vmem:[%s382] sm:$0x7]
      %v386 = vunpack.c.l.b16 %v380
      %v387 = vunpack.c.h.b16 %v380
      %v388 = vunpack.c.l.b16 %v381
      %v389 = vpack.c.b16 %v386, %v386
      %v390 = vpack.c.b16 %v387, %v387
      %v391 = vpack.c.b16 %v388, %v388
      %392 = vrot.lane.b32.xlu0 %v389, 126
      %v393 = vpop.permute.xlu0 %392
      %394 = vrot.lane.b32.xlu0 %v390, 126
      %v395 = vpop.permute.xlu0 %394
      %396 = vrot.lane.b32.xlu0 %v391, 126
      %v397 = vpop.permute.xlu0 %396
      %vm398 = vcmask 1031168
      %v399 = vsel %vm398, %v393, %v395
      %v400 = vsel %vm398, %v395, %v397
      %v402 = vsel %vm235, %v383, 0
      %v405 = vsel %vm239, %v399, 0
      %v408 = vsel %vm239, %v400, 0
      %410 = vmatprep.subr.bf16.mxu0 %v408
      %411 = vmatpush1.bf16.msra.mxu0 %v405
      %412 = vmatprep.subr.bf16.mxu0 0
      %413 = vmatpush1.bf16.msra.mxu0 0
      %414 = vmatprep.subr.bf16.mxu0 0
      %415 = vmatpush1.bf16.msra.mxu0 0
      %416 = vmatprep.subr.bf16.mxu0 0
      %417 = vmatpush1.bf16.msra.mxu0 0
      %418 = vmatprep.subr.bf16.mxu0 0
      %419 = vmatpush1.bf16.msra.mxu0 0
      %420 = vmatprep.subr.bf16.mxu0 0
      %421 = vmatpush1.bf16.msra.mxu0 0
      %422 = vmatprep.subr.bf16.mxu0 0
      %423 = vmatpush1.bf16.msra.mxu0 0
      %424 = vmatprep.subr.bf16.mxu0 0
      %425 = vmatpush1.bf16.msra.mxu0 0
      %426 = vmatprep.subr.bf16.mxu0 0
      %427 = vmatpush1.bf16.msra.mxu0 0
      %428 = vmatprep.subr.bf16.mxu0 0
      %429 = vmatpush1.bf16.msra.mxu0 0
      %430 = vmatprep.subr.bf16.mxu0 0
      %431 = vmatpush1.bf16.msra.mxu0 0
      %432 = vmatprep.subr.bf16.mxu0 0
      %433 = vmatpush1.bf16.msra.mxu0 0
      %434 = vmatprep.subr.bf16.mxu0 0
      %435 = vmatpush1.bf16.msra.mxu0 0
      %436 = vmatprep.subr.bf16.mxu0 0
      %437 = vmatpush1.bf16.msra.mxu0 0
      %438 = vmatprep.subr.bf16.mxu0 0
      %439 = vmatpush1.bf16.msra.mxu0 0
      %440 = vmatprep.subr.bf16.mxu0 0
      %441 = vmatpush1.bf16.msra.mxu0 0
      %442 = vmatprep.mubr.bf16.mxu0 0
      %443 = vmatmul.mubr.bf16.gmra.mrb[0].mxu0 %v402
      %v444 = vpop.f32.mrb[0].mxu0
      %v445 = vadd.f32 0.0, %v444
      %v446 = vpop.f32.mrb[0].mxu0
      %v447 = vadd.f32 0.0, %v446
      %v448 = vpop.f32.mrb[0].mxu0
      %v449 = vpop.f32.mrb[0].mxu0
      %450 = vdwg.mxu0
      %s451 = scalar_lea.vmem %s2, 4
      %v452 = vld [vmem:[%s451] sm:$0x3]
      %v454 = vlaneseq
      %v455 = vshrl.u32 %v454, 7
      %v456 = vsub.s32 0, %v455
      %v457 = vrot.slane %v452, %v456
      %v458 = vlaneseq
      %v459 = vshrl.u32 %v458, 7
      %v460 = vsub.s32 1, %v459
      %v461 = vrot.slane %v452, %v460
      %v464 = vmul.f32 %v445, %v457
      %v465 = vmul.f32 %v447, %v461
      %v466 = vld [vmem:[%s226] sm:$0x3f]
      %v467 = vld [vmem:[%s226 + $0x8] sm:$0x3f]
      %v468 = vadd.f32 %v466, %v464
      %v469 = vadd.f32 %v467, %v465
      %470 = vst [vmem:[%s226] sm:$0x3f] %v468
      %471 = vst [vmem:[%s226 + $0x8] sm:$0x3f] %v469
      %v472 = vld [vmem:[%s212] sm:$0xff]
      %v473 = vld [vmem:[%s212 + $0x8] sm:$0xf]
      %s474 = scalar_lea.vmem %s217, 12
      %v475 = vld [vmem:[%s474] sm:$0x7]
      %v478 = vunpack.c.l.b16 %v472
      %v479 = vunpack.c.h.b16 %v472
      %v480 = vunpack.c.l.b16 %v473
      %v481 = vpack.c.b16 %v478, %v478
      %v482 = vpack.c.b16 %v479, %v479
      %v483 = vpack.c.b16 %v480, %v480
      %484 = vrot.lane.b32.xlu0 %v481, 112
      %v485 = vpop.permute.xlu0 %484
      %486 = vrot.lane.b32.xlu0 %v482, 112
      %v487 = vpop.permute.xlu0 %486
      %488 = vrot.lane.b32.xlu0 %v483, 112
      %v489 = vpop.permute.xlu0 %488
      %vm490 = vcmask 916480
      %v491 = vsel %vm490, %v485, %v487
      %v492 = vsel %vm490, %v487, %v489
      %v494 = vsel %vm235, %v475, 0
      %v497 = vsel %vm239, %v491, 0
      %v500 = vsel %vm239, %v492, 0
      %502 = vmatprep.subr.bf16.mxu0 %v500
      %503 = vmatpush1.bf16.msra.mxu0 %v497
      %504 = vmatprep.subr.bf16.mxu0 0
      %505 = vmatpush1.bf16.msra.mxu0 0
      %506 = vmatprep.subr.bf16.mxu0 0
      %507 = vmatpush1.bf16.msra.mxu0 0
      %508 = vmatprep.subr.bf16.mxu0 0
      %509 = vmatpush1.bf16.msra.mxu0 0
      %510 = vmatprep.subr.bf16.mxu0 0
      %511 = vmatpush1.bf16.msra.mxu0 0
      %512 = vmatprep.subr.bf16.mxu0 0
      %513 = vmatpush1.bf16.msra.mxu0 0
      %514 = vmatprep.subr.bf16.mxu0 0
      %515 = vmatpush1.bf16.msra.mxu0 0
      %516 = vmatprep.subr.bf16.mxu0 0
      %517 = vmatpush1.bf16.msra.mxu0 0
      %518 = vmatprep.subr.bf16.mxu0 0
      %519 = vmatpush1.bf16.msra.mxu0 0
      %520 = vmatprep.subr.bf16.mxu0 0
      %521 = vmatpush1.bf16.msra.mxu0 0
      %522 = vmatprep.subr.bf16.mxu0 0
      %523 = vmatpush1.bf16.msra.mxu0 0
      %524 = vmatprep.subr.bf16.mxu0 0
      %525 = vmatpush1.bf16.msra.mxu0 0
      %526 = vmatprep.subr.bf16.mxu0 0
      %527 = vmatpush1.bf16.msra.mxu0 0
      %528 = vmatprep.subr.bf16.mxu0 0
      %529 = vmatpush1.bf16.msra.mxu0 0
      %530 = vmatprep.subr.bf16.mxu0 0
      %531 = vmatpush1.bf16.msra.mxu0 0
      %532 = vmatprep.subr.bf16.mxu0 0
      %533 = vmatpush1.bf16.msra.mxu0 0
      %534 = vmatprep.mubr.bf16.mxu0 0
      %535 = vmatmul.mubr.bf16.gmra.mrb[0].mxu0 %v494
      %v536 = vpop.f32.mrb[0].mxu0
      %v537 = vadd.f32 0.0, %v536
      %v538 = vpop.f32.mrb[0].mxu0
      %v539 = vadd.f32 0.0, %v538
      %v540 = vpop.f32.mrb[0].mxu0
      %v541 = vpop.f32.mrb[0].mxu0
      %542 = vdwg.mxu0
      %v543 = vld [vmem:[%s2] sm:$0x3]
      %v545 = vlaneseq
      %v546 = vshrl.u32 %v545, 7
      %v547 = vsub.s32 0, %v546
      %v548 = vrot.slane %v543, %v547
      %v549 = vlaneseq
      %v550 = vshrl.u32 %v549, 7
      %v551 = vsub.s32 1, %v550
      %v552 = vrot.slane %v543, %v551
      %v555 = vmul.f32 %v537, %v548
      %v556 = vmul.f32 %v539, %v552
      %v557 = vld [vmem:[%s226] sm:$0x3f]
      %v558 = vld [vmem:[%s226 + $0x8] sm:$0x3f]
      %v559 = vadd.f32 %v557, %v555
      %v560 = vadd.f32 %v558, %v556
      %561 = vst [vmem:[%s226] sm:$0x3f] %v559
      %562 = vst [vmem:[%s226 + $0x8] sm:$0x3f] %v560
      %v563 = vld [vmem:[%s212] sm:$0xff]
      %v564 = vld [vmem:[%s212 + $0x8] sm:$0xf]
      %s565 = scalar_lea.vmem %s217, 16
      %v566 = vld [vmem:[%s565] sm:$0x7]
      %v569 = vunpack.c.l.b16 %v563
      %v570 = vunpack.c.h.b16 %v563
      %v571 = vunpack.c.l.b16 %v564
      %v572 = vpack.c.b16 %v569, %v569
      %v573 = vpack.c.b16 %v570, %v570
      %v574 = vpack.c.b16 %v571, %v571
      %575 = vrot.lane.b32.xlu0 %v572, 111
      %v576 = vpop.permute.xlu0 %575
      %577 = vrot.lane.b32.xlu0 %v573, 111
      %v578 = vpop.permute.xlu0 %577
      %579 = vrot.lane.b32.xlu0 %v574, 111
      %v580 = vpop.permute.xlu0 %579
      %vm581 = vcmask 908288
      %v582 = vsel %vm581, %v576, %v578
      %v583 = vsel %vm581, %v578, %v580
      %v585 = vsel %vm235, %v566, 0
      %v588 = vsel %vm239, %v582, 0
      %v591 = vsel %vm239, %v583, 0
      %593 = vmatprep.subr.bf16.mxu0 %v591
      %594 = vmatpush1.bf16.msra.mxu0 %v588
      %595 = vmatprep.subr.bf16.mxu0 0
      %596 = vmatpush1.bf16.msra.mxu0 0
      %597 = vmatprep.subr.bf16.mxu0 0
      %598 = vmatpush1.bf16.msra.mxu0 0
      %599 = vmatprep.subr.bf16.mxu0 0
      %600 = vmatpush1.bf16.msra.mxu0 0
      %601 = vmatprep.subr.bf16.mxu0 0
      %602 = vmatpush1.bf16.msra.mxu0 0
      %603 = vmatprep.subr.bf16.mxu0 0
      %604 = vmatpush1.bf16.msra.mxu0 0
      %605 = vmatprep.subr.bf16.mxu0 0
      %606 = vmatpush1.bf16.msra.mxu0 0
      %607 = vmatprep.subr.bf16.mxu0 0
      %608 = vmatpush1.bf16.msra.mxu0 0
      %609 = vmatprep.subr.bf16.mxu0 0
      %610 = vmatpush1.bf16.msra.mxu0 0
      %611 = vmatprep.subr.bf16.mxu0 0
      %612 = vmatpush1.bf16.msra.mxu0 0
      %613 = vmatprep.subr.bf16.mxu0 0
      %614 = vmatpush1.bf16.msra.mxu0 0
      %615 = vmatprep.subr.bf16.mxu0 0
      %616 = vmatpush1.bf16.msra.mxu0 0
      %617 = vmatprep.subr.bf16.mxu0 0
      %618 = vmatpush1.bf16.msra.mxu0 0
      %619 = vmatprep.subr.bf16.mxu0 0
      %620 = vmatpush1.bf16.msra.mxu0 0
      %621 = vmatprep.subr.bf16.mxu0 0
      %622 = vmatpush1.bf16.msra.mxu0 0
      %623 = vmatprep.subr.bf16.mxu0 0
      %624 = vmatpush1.bf16.msra.mxu0 0
      %625 = vmatprep.mubr.bf16.mxu0 0
      %626 = vmatmul.mubr.bf16.gmra.mrb[0].mxu0 %v585
      %v627 = vpop.f32.mrb[0].mxu0
      %v628 = vadd.f32 0.0, %v627
      %v629 = vpop.f32.mrb[0].mxu0
      %v630 = vadd.f32 0.0, %v629
      %v631 = vpop.f32.mrb[0].mxu0
      %v632 = vpop.f32.mrb[0].mxu0
      %633 = vdwg.mxu0
      %v634 = vld [vmem:[%s226] sm:$0x3f]
      %v635 = vld [vmem:[%s226 + $0x8] sm:$0x3f]
      %v636 = vadd.f32 %v634, %v628
      %v637 = vadd.f32 %v635, %v630
      %638 = vst [vmem:[%s226] sm:$0x3f] %v636
      %639 = vst [vmem:[%s226 + $0x8] sm:$0x3f] %v637
      %v640 = vld [vmem:[%s212] sm:$0xff]
      %v641 = vld [vmem:[%s212 + $0x8] sm:$0xf]
      %s642 = scalar_lea.vmem %s217, 20
      %v643 = vld [vmem:[%s642] sm:$0x7]
      %v646 = vunpack.c.l.b16 %v640
      %v647 = vunpack.c.h.b16 %v640
      %v648 = vunpack.c.l.b16 %v641
      %v649 = vpack.c.b16 %v646, %v646
      %v650 = vpack.c.b16 %v647, %v647
      %v651 = vpack.c.b16 %v648, %v648
      %652 = vrot.lane.b32.xlu0 %v649, 110
      %v653 = vpop.permute.xlu0 %652
      %654 = vrot.lane.b32.xlu0 %v650, 110
      %v655 = vpop.permute.xlu0 %654
      %656 = vrot.lane.b32.xlu0 %v651, 110
      %v657 = vpop.permute.xlu0 %656
      %vm658 = vcmask 900096
      %v659 = vsel %vm658, %v653, %v655
      %v660 = vsel %vm658, %v655, %v657
      %v662 = vsel %vm235, %v643, 0
      %v665 = vsel %vm239, %v659, 0
      %v668 = vsel %vm239, %v660, 0
      %670 = vmatprep.subr.bf16.mxu0 %v668
      %671 = vmatpush1.bf16.msra.mxu0 %v665
      %672 = vmatprep.subr.bf16.mxu0 0
      %673 = vmatpush1.bf16.msra.mxu0 0
      %674 = vmatprep.subr.bf16.mxu0 0
      %675 = vmatpush1.bf16.msra.mxu0 0
      %676 = vmatprep.subr.bf16.mxu0 0
      %677 = vmatpush1.bf16.msra.mxu0 0
      %678 = vmatprep.subr.bf16.mxu0 0
      %679 = vmatpush1.bf16.msra.mxu0 0
      %680 = vmatprep.subr.bf16.mxu0 0
      %681 = vmatpush1.bf16.msra.mxu0 0
      %682 = vmatprep.subr.bf16.mxu0 0
      %683 = vmatpush1.bf16.msra.mxu0 0
      %684 = vmatprep.subr.bf16.mxu0 0
      %685 = vmatpush1.bf16.msra.mxu0 0
      %686 = vmatprep.subr.bf16.mxu0 0
      %687 = vmatpush1.bf16.msra.mxu0 0
      %688 = vmatprep.subr.bf16.mxu0 0
      %689 = vmatpush1.bf16.msra.mxu0 0
      %690 = vmatprep.subr.bf16.mxu0 0
      %691 = vmatpush1.bf16.msra.mxu0 0
      %692 = vmatprep.subr.bf16.mxu0 0
      %693 = vmatpush1.bf16.msra.mxu0 0
      %694 = vmatprep.subr.bf16.mxu0 0
      %695 = vmatpush1.bf16.msra.mxu0 0
      %696 = vmatprep.subr.bf16.mxu0 0
      %697 = vmatpush1.bf16.msra.mxu0 0
      %698 = vmatprep.subr.bf16.mxu0 0
      %699 = vmatpush1.bf16.msra.mxu0 0
      %700 = vmatprep.subr.bf16.mxu0 0
      %701 = vmatpush1.bf16.msra.mxu0 0
      %702 = vmatprep.mubr.bf16.mxu0 0
      %703 = vmatmul.mubr.bf16.gmra.mrb[0].mxu0 %v662
      %v704 = vpop.f32.mrb[0].mxu0
      %v705 = vadd.f32 0.0, %v704
      %v706 = vpop.f32.mrb[0].mxu0
      %v707 = vadd.f32 0.0, %v706
      %v708 = vpop.f32.mrb[0].mxu0
      %v709 = vpop.f32.mrb[0].mxu0
      %710 = vdwg.mxu0
      %v711 = vld [vmem:[%s451] sm:$0x3]
      %v713 = vlaneseq
      %v714 = vshrl.u32 %v713, 7
      %v715 = vsub.s32 0, %v714
      %v716 = vrot.slane %v711, %v715
      %v717 = vlaneseq
      %v718 = vshrl.u32 %v717, 7
      %v719 = vsub.s32 1, %v718
      %v720 = vrot.slane %v711, %v719
      %v723 = vmul.f32 %v705, %v716
      %v724 = vmul.f32 %v707, %v720
      %v725 = vld [vmem:[%s226] sm:$0x3f]
      %v726 = vld [vmem:[%s226 + $0x8] sm:$0x3f]
      %v727 = vadd.f32 %v725, %v723
      %v728 = vadd.f32 %v726, %v724
      %729 = vst [vmem:[%s226] sm:$0x3f] %v727
      %730 = vst [vmem:[%s226 + $0x8] sm:$0x3f] %v728
      %v731 = vld [vmem:[%s212] sm:$0xff]
      %v732 = vld [vmem:[%s212 + $0x8] sm:$0xf]
      %s733 = scalar_lea.vmem %s217, 24
      %v734 = vld [vmem:[%s733] sm:$0x7]
      %v737 = vunpack.c.l.b16 %v731
      %v738 = vunpack.c.h.b16 %v731
      %v739 = vunpack.c.l.b16 %v732
      %v740 = vpack.c.b16 %v737, %v737
      %v741 = vpack.c.b16 %v738, %v738
      %v742 = vpack.c.b16 %v739, %v739
      %743 = vrot.lane.b32.xlu0 %v740, 96
      %v744 = vpop.permute.xlu0 %743
      %745 = vrot.lane.b32.xlu0 %v741, 96
      %v746 = vpop.permute.xlu0 %745
      %747 = vrot.lane.b32.xlu0 %v742, 96
      %v748 = vpop.permute.xlu0 %747
      %vm749 = vcmask 785408
      %v750 = vsel %vm749, %v744, %v746
      %v751 = vsel %vm749, %v746, %v748
      %v753 = vsel %vm235, %v734, 0
      %v756 = vsel %vm239, %v750, 0
      %v759 = vsel %vm239, %v751, 0
      %761 = vmatprep.subr.bf16.mxu0 %v759
      %762 = vmatpush1.bf16.msra.mxu0 %v756
      %763 = vmatprep.subr.bf16.mxu0 0
      %764 = vmatpush1.bf16.msra.mxu0 0
      %765 = vmatprep.subr.bf16.mxu0 0
      %766 = vmatpush1.bf16.msra.mxu0 0
      %767 = vmatprep.subr.bf16.mxu0 0
      %768 = vmatpush1.bf16.msra.mxu0 0
      %769 = vmatprep.subr.bf16.mxu0 0
      %770 = vmatpush1.bf16.msra.mxu0 0
      %771 = vmatprep.subr.bf16.mxu0 0
      %772 = vmatpush1.bf16.msra.mxu0 0
      %773 = vmatprep.subr.bf16.mxu0 0
      %774 = vmatpush1.bf16.msra.mxu0 0
      %775 = vmatprep.subr.bf16.mxu0 0
      %776 = vmatpush1.bf16.msra.mxu0 0
      %777 = vmatprep.subr.bf16.mxu0 0
      %778 = vmatpush1.bf16.msra.mxu0 0
      %779 = vmatprep.subr.bf16.mxu0 0
      %780 = vmatpush1.bf16.msra.mxu0 0
      %781 = vmatprep.subr.bf16.mxu0 0
      %782 = vmatpush1.bf16.msra.mxu0 0
      %783 = vmatprep.subr.bf16.mxu0 0
      %784 = vmatpush1.bf16.msra.mxu0 0
      %785 = vmatprep.subr.bf16.mxu0 0
      %786 = vmatpush1.bf16.msra.mxu0 0
      %787 = vmatprep.subr.bf16.mxu0 0
      %788 = vmatpush1.bf16.msra.mxu0 0
      %789 = vmatprep.subr.bf16.mxu0 0
      %790 = vmatpush1.bf16.msra.mxu0 0
      %791 = vmatprep.subr.bf16.mxu0 0
      %792 = vmatpush1.bf16.msra.mxu0 0
      %793 = vmatprep.mubr.bf16.mxu0 0
      %794 = vmatmul.mubr.bf16.gmra.mrb[0].mxu0 %v753
      %v795 = vpop.f32.mrb[0].mxu0
      %v796 = vadd.f32 0.0, %v795
      %v797 = vpop.f32.mrb[0].mxu0
      %v798 = vadd.f32 0.0, %v797
      %v799 = vpop.f32.mrb[0].mxu0
      %v800 = vpop.f32.mrb[0].mxu0
      %801 = vdwg.mxu0
      %v802 = vld [vmem:[%s2] sm:$0x3]
      %v804 = vlaneseq
      %v805 = vshrl.u32 %v804, 7
      %v806 = vsub.s32 0, %v805
      %v807 = vrot.slane %v802, %v806
      %v808 = vlaneseq
      %v809 = vshrl.u32 %v808, 7
      %v810 = vsub.s32 1, %v809
      %v811 = vrot.slane %v802, %v810
      %v814 = vmul.f32 %v796, %v807
      %v815 = vmul.f32 %v798, %v811
      %v816 = vld [vmem:[%s226] sm:$0x3f]
      %v817 = vld [vmem:[%s226 + $0x8] sm:$0x3f]
      %v818 = vadd.f32 %v816, %v814
      %v819 = vadd.f32 %v817, %v815
      %820 = vst [vmem:[%s226] sm:$0x3f] %v818
      %821 = vst [vmem:[%s226 + $0x8] sm:$0x3f] %v819
      %v822 = vld [vmem:[%s212] sm:$0xff]
      %v823 = vld [vmem:[%s212 + $0x8] sm:$0xf]
      %s824 = scalar_lea.vmem %s217, 28
      %v825 = vld [vmem:[%s824] sm:$0x7]
      %v828 = vunpack.c.l.b16 %v822
      %v829 = vunpack.c.h.b16 %v822
      %v830 = vunpack.c.l.b16 %v823
      %v831 = vpack.c.b16 %v828, %v828
      %v832 = vpack.c.b16 %v829, %v829
      %v833 = vpack.c.b16 %v830, %v830
      %834 = vrot.lane.b32.xlu0 %v831, 95
      %v835 = vpop.permute.xlu0 %834
      %836 = vrot.lane.b32.xlu0 %v832, 95
      %v837 = vpop.permute.xlu0 %836
      %838 = vrot.lane.b32.xlu0 %v833, 95
      %v839 = vpop.permute.xlu0 %838
      %vm840 = vcmask 777216
      %v841 = vsel %vm840, %v835, %v837
      %v842 = vsel %vm840, %v837, %v839
      %v844 = vsel %vm235, %v825, 0
      %v847 = vsel %vm239, %v841, 0
      %v850 = vsel %vm239, %v842, 0
      %852 = vmatprep.subr.bf16.mxu0 %v850
      %853 = vmatpush1.bf16.msra.mxu0 %v847
      %854 = vmatprep.subr.bf16.mxu0 0
      %855 = vmatpush1.bf16.msra.mxu0 0
      %856 = vmatprep.subr.bf16.mxu0 0
      %857 = vmatpush1.bf16.msra.mxu0 0
      %858 = vmatprep.subr.bf16.mxu0 0
      %859 = vmatpush1.bf16.msra.mxu0 0
      %860 = vmatprep.subr.bf16.mxu0 0
      %861 = vmatpush1.bf16.msra.mxu0 0
      %862 = vmatprep.subr.bf16.mxu0 0
      %863 = vmatpush1.bf16.msra.mxu0 0
      %864 = vmatprep.subr.bf16.mxu0 0
      %865 = vmatpush1.bf16.msra.mxu0 0
      %866 = vmatprep.subr.bf16.mxu0 0
      %867 = vmatpush1.bf16.msra.mxu0 0
      %868 = vmatprep.subr.bf16.mxu0 0
      %869 = vmatpush1.bf16.msra.mxu0 0
      %870 = vmatprep.subr.bf16.mxu0 0
      %871 = vmatpush1.bf16.msra.mxu0 0
      %872 = vmatprep.subr.bf16.mxu0 0
      %873 = vmatpush1.bf16.msra.mxu0 0
      %874 = vmatprep.subr.bf16.mxu0 0
      %875 = vmatpush1.bf16.msra.mxu0 0
      %876 = vmatprep.subr.bf16.mxu0 0
      %877 = vmatpush1.bf16.msra.mxu0 0
      %878 = vmatprep.subr.bf16.mxu0 0
      %879 = vmatpush1.bf16.msra.mxu0 0
      %880 = vmatprep.subr.bf16.mxu0 0
      %881 = vmatpush1.bf16.msra.mxu0 0
      %882 = vmatprep.subr.bf16.mxu0 0
      %883 = vmatpush1.bf16.msra.mxu0 0
      %884 = vmatprep.mubr.bf16.mxu0 0
      %885 = vmatmul.mubr.bf16.gmra.mrb[0].mxu0 %v844
      %v886 = vpop.f32.mrb[0].mxu0
      %v887 = vadd.f32 0.0, %v886
      %v888 = vpop.f32.mrb[0].mxu0
      %v889 = vadd.f32 0.0, %v888
      %v890 = vpop.f32.mrb[0].mxu0
      %v891 = vpop.f32.mrb[0].mxu0
      %892 = vdwg.mxu0
      %v893 = vld [vmem:[%s226] sm:$0x3f]
      %v894 = vld [vmem:[%s226 + $0x8] sm:$0x3f]
      %v895 = vadd.f32 %v893, %v887
      %v896 = vadd.f32 %v894, %v889
      %897 = vst [vmem:[%s226] sm:$0x3f] %v895
      %898 = vst [vmem:[%s226 + $0x8] sm:$0x3f] %v896
      %v899 = vld [vmem:[%s212] sm:$0xff]
      %v900 = vld [vmem:[%s212 + $0x8] sm:$0xf]
      %s901 = scalar_lea.vmem %s217, 32
      %v902 = vld [vmem:[%s901] sm:$0x7]
      %v905 = vunpack.c.l.b16 %v899
      %v906 = vunpack.c.h.b16 %v899
      %v907 = vunpack.c.l.b16 %v900
      %v908 = vpack.c.b16 %v905, %v905
      %v909 = vpack.c.b16 %v906, %v906
      %v910 = vpack.c.b16 %v907, %v907
      %911 = vrot.lane.b32.xlu0 %v908, 94
      %v912 = vpop.permute.xlu0 %911
      %913 = vrot.lane.b32.xlu0 %v909, 94
      %v914 = vpop.permute.xlu0 %913
      %915 = vrot.lane.b32.xlu0 %v910, 94
      %v916 = vpop.permute.xlu0 %915
      %vm917 = vcmask 769024
      %v918 = vsel %vm917, %v912, %v914
      %v919 = vsel %vm917, %v914, %v916
      %v921 = vsel %vm235, %v902, 0
      %v924 = vsel %vm239, %v918, 0
      %v927 = vsel %vm239, %v919, 0
      %929 = vmatprep.subr.bf16.mxu0 %v927
      %930 = vmatpush1.bf16.msra.mxu0 %v924
      %931 = vmatprep.subr.bf16.mxu0 0
      %932 = vmatpush1.bf16.msra.mxu0 0
      %933 = vmatprep.subr.bf16.mxu0 0
      %934 = vmatpush1.bf16.msra.mxu0 0
      %935 = vmatprep.subr.bf16.mxu0 0
      %936 = vmatpush1.bf16.msra.mxu0 0
      %937 = vmatprep.subr.bf16.mxu0 0
      %938 = vmatpush1.bf16.msra.mxu0 0
      %939 = vmatprep.subr.bf16.mxu0 0
      %940 = vmatpush1.bf16.msra.mxu0 0
      %941 = vmatprep.subr.bf16.mxu0 0
      %942 = vmatpush1.bf16.msra.mxu0 0
      %943 = vmatprep.subr.bf16.mxu0 0
      %944 = vmatpush1.bf16.msra.mxu0 0
      %945 = vmatprep.subr.bf16.mxu0 0
      %946 = vmatpush1.bf16.msra.mxu0 0
      %947 = vmatprep.subr.bf16.mxu0 0
      %948 = vmatpush1.bf16.msra.mxu0 0
      %949 = vmatprep.subr.bf16.mxu0 0
      %950 = vmatpush1.bf16.msra.mxu0 0
      %951 = vmatprep.subr.bf16.mxu0 0
      %952 = vmatpush1.bf16.msra.mxu0 0
      %953 = vmatprep.subr.bf16.mxu0 0
      %954 = vmatpush1.bf16.msra.mxu0 0
      %955 = vmatprep.subr.bf16.mxu0 0
      %956 = vmatpush1.bf16.msra.mxu0 0
      %957 = vmatprep.subr.bf16.mxu0 0
      %958 = vmatpush1.bf16.msra.mxu0 0
      %959 = vmatprep.subr.bf16.mxu0 0
      %960 = vmatpush1.bf16.msra.mxu0 0
      %961 = vmatprep.mubr.bf16.mxu0 0
      %962 = vmatmul.mubr.bf16.gmra.mrb[0].mxu0 %v921
      %v963 = vpop.f32.mrb[0].mxu0
      %v964 = vadd.f32 0.0, %v963
      %v965 = vpop.f32.mrb[0].mxu0
      %v966 = vadd.f32 0.0, %v965
      %v967 = vpop.f32.mrb[0].mxu0
      %v968 = vpop.f32.mrb[0].mxu0
      %969 = vdwg.mxu0
      %v970 = vld [vmem:[%s451] sm:$0x3]
      %v972 = vlaneseq
      %v973 = vshrl.u32 %v972, 7
      %v974 = vsub.s32 0, %v973
      %v975 = vrot.slane %v970, %v974
      %v976 = vlaneseq
      %v977 = vshrl.u32 %v976, 7
      %v978 = vsub.s32 1, %v977
      %v979 = vrot.slane %v970, %v978
      %v982 = vmul.f32 %v964, %v975
      %v983 = vmul.f32 %v966, %v979
      %v984 = vld [vmem:[%s226] sm:$0x3f]
      %v985 = vld [vmem:[%s226 + $0x8] sm:$0x3f]
      %v986 = vadd.f32 %v984, %v982
      %v987 = vadd.f32 %v985, %v983
      %988 = vst [vmem:[%s226] sm:$0x3f] %v986
      %989 = vst [vmem:[%s226 + $0x8] sm:$0x3f] %v987
      %p990 = scmp.lt.s32.totalorder %s18, 0
      %s991 = scalar_select %p990, %s18, 0
      %p992 = scmp.lt.s32.totalorder %s19, 1
      %s993 = scalar_select %p992, %s19, 1
      %s994 = smul.addr %s993, 2
      %s995 = smul.addr %s991, 4
      %s996 = sadd.s32 %s994, %s995
      %s997 = smul.addr %s996, 8
      %s998 = scalar_lea.vmem %s3, %s997
      // Predicated region
      $region33: #{forward.2} parent=31 // pred_check
        %p999 = pneg %p121
      $region34: #{forward.2} parent=31 // pred_check_branch
        %1001 = sbr.rel (%p999) target = $region36
      $region35: #{forward.2} parent=31 // pred_region
        _
      $region36: #{forward.2} parent=31 // pred_fallthru
        _
    $region32: #{forward.2} parent=5 // pred_fallthru
      _
    %p1002 = scmp.le.s32.totalorder 2, %s9
    // Predicated region
    $region37: #{forward.2} parent=5 // pred_check
      %p1003 = pneg %p1002
    $region38: #{forward.2} parent=5 // pred_check_branch
      %1005 = sbr.rel (%p1003) target = $region40
    $region39: #{forward.2} parent=5 // pred_region
      %s1006 = ssub.s32 %s9, 2
      // Predicated region
      $region41: #{forward.2} parent=39 // pred_check
        %p1007 = pneg %p127
      $region42: #{forward.2} parent=39 // pred_check_branch
        %1009 = sbr.rel (%p1007) target = $region44
      $region43: #{forward.2} parent=39 // pred_region
        %p1010 = scmp.lt.s32.totalorder %s20, 0
        %s1011 = scalar_select %p1010, %s20, 0
        %p1012 = scmp.lt.s32.totalorder %s21, 1
        %s1013 = scalar_select %p1012, %s21, 1
        %s1014 = smul.addr %s1013, 2
        %s1015 = smul.addr %s1011, 4
        %s1016 = sadd.s32 %s1014, %s1015
        %s1017 = smul.addr %s1016, 8
        %s1018 = scalar_lea.vmem %s3, %s1017
      $region44: #{forward.2} parent=39 // pred_fallthru
        _
    $region40: #{forward.2} parent=5 // pred_fallthru
      _
  $region6: #{forward.2} parent=0 // loop_footer
    %s13 = sadd.s32 1, %s9
  $region7: #{forward.2} parent=0 // loop_footer_branch
    %8 = sbr.rel target = $region3
  $region8: #{forward.2} parent=0 // loop_exit
    _

</llo_original>
